<compile_context>
chip_gen: v5e
topology: v5e:2x2
jax: 0.10.0
libtpu: 0.0.40
codegen_flags: <defaults>
</compile_context>

<pallas_src>
from functools import partial

import numpy as np
import jax
import jax.numpy as jnp
from jax import lax
from jax.experimental import pallas as pl
from jax.experimental.pallas import tpu as pltpu


# ----------------------------- fused kernel -------------------------------- #

def _fwd_kernel(x_ref, bias_ref, wqkv_ref, bqkv_ref, wo_ref, bo_ref,
                g1_ref, be1_ref, wf_ref, bf_ref, out_ref,
                qh_s, kh_s, *, depth, heads, d, H, L):
    """One batch element: all encoder blocks, everything resident in VMEM."""
    x = x_ref[0]                       # (L, H) current activations
    bias = bias_ref[...]               # (heads*L, heads*L): 0 in-block, -1e30 off
    lane = lax.broadcasted_iota(jnp.int32, (L, H), 1)
    inv_h = 1.0 / H                    # folds the two 1/sqrt(H) scalings

    for bi in range(depth):
        # ---- fused Q|K|V projection: one (L,H)@(H,3H) MXU op ----
        qkv = jnp.dot(x, wqkv_ref[bi],
                      preferred_element_type=jnp.float32) + bqkv_ref[bi]
        q = qkv[:, 0:H]
        k = qkv[:, H:2 * H]
        v = qkv[:, 2 * H:3 * H]

        # ---- torch raw-reshape head view, built in-kernel ----
        # element (l, h) belongs to flat segment p = l*heads + h//d of the
        # (heads, L, d) view.  Restack Q/K d-wide segments (group-major order
        # i = c*L + l) into (heads*L, d) scratch so ALL (head) score blocks
        # come out of a single MXU matmul instead of tiny per-head steps.
        for c in range(heads):
            qh_s[c * L:(c + 1) * L, :] = q[:, c * d:(c + 1) * d]
            kh_s[c * L:(c + 1) * L, :] = k[:, c * d:(c + 1) * d]

        # scores for every segment pair; contraction on last dims (no k.T)
        s = lax.dot_general(qh_s[...], kh_s[...],
                            (((1,), (1,)), ((), ())),
                            preferred_element_type=jnp.float32)
        s = s * inv_h + bias           # mask pairs from different heads

        # softmax over the *query* axis a (rows), per column b  (torch dim=2)
        cmax = jnp.max(s, axis=0, keepdims=True)
        es = jnp.exp(s - cmax)         # off-block entries underflow to exact 0
        csum = jnp.sum(es, axis=0, keepdims=True)
        pmat = es * pl.reciprocal(csum, approx=True)

        # einsum('neab,neax->neax') == (sum_b P[a,b]) * V[a,x]
        w = jnp.sum(pmat, axis=1, keepdims=True)        # (heads*L, 1)

        # scatter w back to the (L, H) layout: factor for (l, h) is
        # w[(h//d)*L + l]; built with lane-group selects (pure VPU, no reshape)
        wfull = jnp.zeros((L, H), jnp.float32)
        for c in range(heads):
            sel = (lane >= c * d) & (lane < (c + 1) * d)
            wc = jnp.broadcast_to(w[c * L:(c + 1) * L, :], (L, H))
            wfull = jnp.where(sel, wc, wfull)
        attn = v * wfull                                 # (L, H)

        # ---- W_o + residual, LayerNorm1, ffn + residual ----
        t = jnp.dot(attn, wo_ref[bi],
                    preferred_element_type=jnp.float32) + bo_ref[bi] + x
        mu = jnp.mean(t, axis=-1, keepdims=True)
        var = jnp.mean((t - mu) ** 2, axis=-1, keepdims=True)   # biased, torch LN
        u = (t - mu) * lax.rsqrt(var + 1e-5) * g1_ref[bi] + be1_ref[bi]
        x = jnp.dot(u, wf_ref[bi],
                    preferred_element_type=jnp.float32) + bf_ref[bi] + u
        # layer_norm_2 output is discarded by the reference -> skipped.

    out_ref[0] = x


# ------------------------------- wrapper ------------------------------------ #

def transformer_forward(X, params, heads):
    """X: (N, L) int32 token ids -> (N, L, H) float32.  Requires L == max_length."""
    # embedding gathers are data-dependent lookups -> plain JAX glue
    tok = params["tok_emb"][X]                       # (N, L, E)
    pos = params["pos_emb"][:X.shape[1]]             # (L, E)
    h0 = tok + pos[None, :, :]
    N, L, H = h0.shape
    d = H // heads
    depth = params["wqkv"].shape[0]
    P = heads * L

    # additive attention mask: segments i = c*L + l and j are in the same head
    # block iff (l*heads + c)//L matches; trace-time numpy constant.
    idx = np.arange(P)
    blk = ((idx % L) * heads + (idx // L)) // L
    bias = jnp.asarray(np.where(blk[:, None] == blk[None, :], 0.0, -1e30),
                       dtype=jnp.float32)

    kernel = partial(_fwd_kernel, depth=depth, heads=heads, d=d, H=H, L=L)

    def wspec(shape):
        return pl.BlockSpec(shape, lambda n: (0,) * len(shape))  # resident block

    fwd = pl.pallas_call(
        kernel,
        grid=(N,),
        in_specs=[
            pl.BlockSpec((1, L, H), lambda n: (n, 0, 0)),        # activations
            wspec((P, P)),                                       # attention mask
            wspec((depth, H, 3 * H)), wspec((depth, 1, 3 * H)),  # wqkv, bqkv
            wspec((depth, H, H)), wspec((depth, 1, H)),          # wo, bo
            wspec((depth, 1, H)), wspec((depth, 1, H)),          # g1, be1
            wspec((depth, H, H)), wspec((depth, 1, H)),          # wf, bf
        ],
        out_specs=pl.BlockSpec((1, L, H), lambda n: (n, 0, 0)),
        out_shape=jax.ShapeDtypeStruct((N, L, H), jnp.float32),
        scratch_shapes=[pltpu.VMEM((P, d), jnp.float32),
                        pltpu.VMEM((P, d), jnp.float32)],
        compiler_params=pltpu.CompilerParams(
            dimension_semantics=("parallel",)),
    )
    return fwd(h0, bias, params["wqkv"], params["bqkv"], params["wo"],
               params["bo"], params["g1"], params["be1"], params["wf"],
               params["bf"])


# ---------------------------- parameter init -------------------------------- #

def init_params(key, vocab_size, embed_size, hidden_size, heads, depth,
                max_length):
    assert embed_size == hidden_size, "residual add requires E == H"
    assert hidden_size % heads == 0
    E, H = embed_size, hidden_size
    keys = jax.random.split(key, 2 + depth)
    nrm = jax.random.normal
    tok_emb = 0.02 * nrm(keys[0], (vocab_size, E), jnp.float32)
    pos_emb = 0.02 * nrm(keys[1], (max_length, E), jnp.float32)
    wqkv, bqkv, wo, bo, g1, be1, wf, bf = ([] for _ in range(8))
    for i in range(depth):
        kk = jax.random.split(keys[2 + i], 10)
        wq, wk, wv = (0.1 * nrm(kk[j], (E, H), jnp.float32) for j in (0, 2, 4))
        bq, bk, bv = (0.1 * nrm(kk[j], (1, H), jnp.float32) for j in (1, 3, 5))
        wqkv.append(jnp.concatenate([wq, wk, wv], axis=1))      # fused (E, 3H)
        bqkv.append(jnp.concatenate([bq, bk, bv], axis=1))      # fused (1, 3H)
        wo.append(0.1 * nrm(kk[6], (H, H), jnp.float32))
        bo.append(0.1 * nrm(kk[7], (1, H), jnp.float32))
        g1.append(jnp.ones((1, H), jnp.float32))    # torch LayerNorm defaults
        be1.append(jnp.zeros((1, H), jnp.float32))
        wf.append(0.1 * nrm(kk[8], (H, H), jnp.float32))
        bf.append(0.1 * nrm(kk[9], (1, H), jnp.float32))
        # layer_norm_2 params exist in torch but never affect the output.
    stack = lambda xs: jnp.stack(xs, axis=0)
    return {"tok_emb": tok_emb, "pos_emb": pos_emb,
            "wqkv": stack(wqkv), "bqkv": stack(bqkv),
            "wo": stack(wo), "bo": stack(bo),
            "g1": stack(g1), "be1": stack(be1),
            "wf": stack(wf), "bf": stack(bf)}


# --------------------------- plain-JAX reference ---------------------------- #

def _reference_forward(X, params, heads):
    """Direct transcription of the torch module (for validation only)."""
    tok = params["tok_emb"][X]
    pos = params["pos_emb"][:X.shape[1]]
    h = tok + pos[None, :, :]
    N, L, H = h.shape
    d = H // heads
    depth = params["wqkv"].shape[0]
    scale = 1.0 / float(np.sqrt(H))
    for bi in range(depth):
        hf = h.reshape(N * L, H)
        qkv = hf @ params["wqkv"][bi] + params["bqkv"][bi]
        q, k, v = qkv[:, :H], qkv[:, H:2 * H], qkv[:, 2 * H:]
        qh = q.reshape(N, heads, L, d) * scale        # torch raw reshape
        kh = k.reshape(N, heads, L, d) * scale
        vh = v.reshape(N, heads, L, d)
        s = jnp.einsum("neax,nebx->neab", qh, kh)
        p = jax.nn.softmax(s, axis=2)                 # softmax over query axis
        o = jnp.einsum("neab,neax->neax", p, vh).reshape(N * L, H)
        t = o @ params["wo"][bi] + params["bo"][bi] + hf
        mu = t.mean(-1, keepdims=True)
        var = ((t - mu) ** 2).mean(-1, keepdims=True)
        u = (t - mu) / jnp.sqrt(var + 1e-5) * params["g1"][bi] + params["be1"][bi]
        h = (u @ params["wf"][bi] + params["bf"][bi] + u).reshape(N, L, H)
    return h


# --------------------------------- main ------------------------------------- #

if __name__ == "__main__":
    vocab_size = 50
    embed_size = 32
    hidden_size = 32
    heads = 4
    depth = 2
    max_length = 8
    N = 2

    key = jax.random.PRNGKey(0)
    pkey, xkey = jax.random.split(key)

    params = init_params(pkey, vocab_size, embed_size, hidden_size, heads,
                         depth, max_length)
    X = jax.random.randint(xkey, (N, max_length), 0, vocab_size, dtype=jnp.int32)

    out = transformer_forward(X, params, heads)
    out = jax.block_until_ready(out)
    assert out.shape == (N, max_length, hidden_size)
    assert out.dtype == jnp.float32

    ref = jax.block_until_ready(_reference_forward(X, params, heads))
    np.testing.assert_allclose(np.asarray(out), np.asarray(ref),
                               rtol=2e-2, atol=2e-2)
    print("KERNEL_OK")
</pallas_src>

<mosaic_0001>
module attributes {stable_mosaic.version = 11 : i64} {
  func.func @_fwd_kernel(%arg0: i32, %arg1: memref<1x8x32xf32, #tpu.memory_space<vmem>>, %arg2: memref<32x32xf32, #tpu.memory_space<vmem>>, %arg3: memref<2x32x96xf32, #tpu.memory_space<vmem>>, %arg4: memref<2x1x96xf32, #tpu.memory_space<vmem>>, %arg5: memref<2x32x32xf32, #tpu.memory_space<vmem>>, %arg6: memref<2x1x32xf32, #tpu.memory_space<vmem>>, %arg7: memref<2x1x32xf32, #tpu.memory_space<vmem>>, %arg8: memref<2x1x32xf32, #tpu.memory_space<vmem>>, %arg9: memref<2x32x32xf32, #tpu.memory_space<vmem>>, %arg10: memref<2x1x32xf32, #tpu.memory_space<vmem>>, %arg11: memref<1x8x32xf32, #tpu.memory_space<vmem>>, %arg12: memref<32x8xf32, #tpu.memory_space<vmem>>, %arg13: memref<32x8xf32, #tpu.memory_space<vmem>>) attributes {dimension_semantics = [#tpu.dimension_semantics<parallel>], iteration_bounds = array<i64: 2>, scalar_prefetch = 0 : i64, scratch_operands = 2 : i64, tpu.core_type = #tpu.core_type<tc>, window_params = [{transform_indices = @transform_0, window_bounds = array<i64: 1, 8, 32>}, {pipeline_mode = #tpu.pipeline_mode<synchronous>, transform_indices = @transform_1, window_bounds = array<i64: 32, 32>}, {pipeline_mode = #tpu.pipeline_mode<synchronous>, transform_indices = @transform_2, window_bounds = array<i64: 2, 32, 96>}, {pipeline_mode = #tpu.pipeline_mode<synchronous>, transform_indices = @transform_3, window_bounds = array<i64: 2, 1, 96>}, {pipeline_mode = #tpu.pipeline_mode<synchronous>, transform_indices = @transform_4, window_bounds = array<i64: 2, 32, 32>}, {pipeline_mode = #tpu.pipeline_mode<synchronous>, transform_indices = @transform_5, window_bounds = array<i64: 2, 1, 32>}, {pipeline_mode = #tpu.pipeline_mode<synchronous>, transform_indices = @transform_6, window_bounds = array<i64: 2, 1, 32>}, {pipeline_mode = #tpu.pipeline_mode<synchronous>, transform_indices = @transform_7, window_bounds = array<i64: 2, 1, 32>}, {pipeline_mode = #tpu.pipeline_mode<synchronous>, transform_indices = @transform_8, window_bounds = array<i64: 2, 32, 32>}, {pipeline_mode = #tpu.pipeline_mode<synchronous>, transform_indices = @transform_9, window_bounds = array<i64: 2, 1, 32>}, {transform_indices = @transform_10, window_bounds = array<i64: 1, 8, 32>}]} {
    %c0 = arith.constant 0 : index
    %c0_0 = arith.constant 0 : index
    %c0_1 = arith.constant 0 : index
    %0 = vector.load %arg1[%c0, %c0_0, %c0_1] : memref<1x8x32xf32, #tpu.memory_space<vmem>>, vector<1x8x32xf32>
    %1 = vector.shape_cast %0 : vector<1x8x32xf32> to vector<8x32xf32>
    %c0_2 = arith.constant 0 : index
    %c0_3 = arith.constant 0 : index
    %2 = vector.load %arg2[%c0_2, %c0_3] : memref<32x32xf32, #tpu.memory_space<vmem>>, vector<32x32xf32>
    %3 = tpu.iota {dimensions = array<i32: 1>} : vector<8x32xi32>
    %c0_4 = arith.constant 0 : index
    %c0_5 = arith.constant 0 : index
    %c0_6 = arith.constant 0 : index
    %4 = vector.load %arg3[%c0_4, %c0_5, %c0_6] : memref<2x32x96xf32, #tpu.memory_space<vmem>>, vector<1x32x96xf32>
    %5 = vector.shape_cast %4 : vector<1x32x96xf32> to vector<32x96xf32>
    %cst = arith.constant dense<0.000000e+00> : vector<8x96xf32>
    %6 = tpu.matmul %1, %5, %cst {dimension_numbers = #tpu.dot_dimension_numbers<[1], [0], [0], [1], [0, 0, 1, 1], [], []>} : vector<8x32xf32>, vector<32x96xf32>, vector<8x96xf32> -> vector<8x96xf32>
    %c0_7 = arith.constant 0 : index
    %c0_8 = arith.constant 0 : index
    %c0_9 = arith.constant 0 : index
    %7 = vector.load %arg4[%c0_7, %c0_8, %c0_9] : memref<2x1x96xf32, #tpu.memory_space<vmem>>, vector<1x1x96xf32>
    %8 = vector.shape_cast %7 : vector<1x1x96xf32> to vector<1x96xf32>
    %9 = vector.broadcast %8 : vector<1x96xf32> to vector<8x96xf32>
    %10 = arith.addf %6, %9 : vector<8x96xf32>
    %11 = vector.extract_strided_slice %10 {offsets = [0, 0], sizes = [8, 32], strides = [1, 1]} : vector<8x96xf32> to vector<8x32xf32>
    %12 = vector.extract_strided_slice %10 {offsets = [0, 32], sizes = [8, 32], strides = [1, 1]} : vector<8x96xf32> to vector<8x32xf32>
    %13 = vector.extract_strided_slice %10 {offsets = [0, 64], sizes = [8, 32], strides = [1, 1]} : vector<8x96xf32> to vector<8x32xf32>
    %14 = vector.extract_strided_slice %11 {offsets = [0, 0], sizes = [8, 8], strides = [1, 1]} : vector<8x32xf32> to vector<8x8xf32>
    %c0_10 = arith.constant 0 : index
    %c0_11 = arith.constant 0 : index
    %15 = vector.load %arg12[%c0_10, %c0_11] : memref<32x8xf32, #tpu.memory_space<vmem>>, vector<8x8xf32>
    tpu.vector_store %arg12[%c0_10, %c0_11], %14 {strides = array<i32>} : memref<32x8xf32, #tpu.memory_space<vmem>>, vector<8x8xf32>,
    %16 = vector.extract_strided_slice %12 {offsets = [0, 0], sizes = [8, 8], strides = [1, 1]} : vector<8x32xf32> to vector<8x8xf32>
    %c0_12 = arith.constant 0 : index
    %c0_13 = arith.constant 0 : index
    %17 = vector.load %arg13[%c0_12, %c0_13] : memref<32x8xf32, #tpu.memory_space<vmem>>, vector<8x8xf32>
    tpu.vector_store %arg13[%c0_12, %c0_13], %16 {strides = array<i32>} : memref<32x8xf32, #tpu.memory_space<vmem>>, vector<8x8xf32>,
    %18 = vector.extract_strided_slice %11 {offsets = [0, 8], sizes = [8, 8], strides = [1, 1]} : vector<8x32xf32> to vector<8x8xf32>
    %c8 = arith.constant 8 : index
    %c0_14 = arith.constant 0 : index
    %19 = vector.load %arg12[%c8, %c0_14] : memref<32x8xf32, #tpu.memory_space<vmem>>, vector<8x8xf32>
    tpu.vector_store %arg12[%c8, %c0_14], %18 {strides = array<i32>} : memref<32x8xf32, #tpu.memory_space<vmem>>, vector<8x8xf32>,
    %20 = vector.extract_strided_slice %12 {offsets = [0, 8], sizes = [8, 8], strides = [1, 1]} : vector<8x32xf32> to vector<8x8xf32>
    %c8_15 = arith.constant 8 : index
    %c0_16 = arith.constant 0 : index
    %21 = vector.load %arg13[%c8_15, %c0_16] : memref<32x8xf32, #tpu.memory_space<vmem>>, vector<8x8xf32>
    tpu.vector_store %arg13[%c8_15, %c0_16], %20 {strides = array<i32>} : memref<32x8xf32, #tpu.memory_space<vmem>>, vector<8x8xf32>,
    %22 = vector.extract_strided_slice %11 {offsets = [0, 16], sizes = [8, 8], strides = [1, 1]} : vector<8x32xf32> to vector<8x8xf32>
    %c16 = arith.constant 16 : index
    %c0_17 = arith.constant 0 : index
    %23 = vector.load %arg12[%c16, %c0_17] : memref<32x8xf32, #tpu.memory_space<vmem>>, vector<8x8xf32>
    tpu.vector_store %arg12[%c16, %c0_17], %22 {strides = array<i32>} : memref<32x8xf32, #tpu.memory_space<vmem>>, vector<8x8xf32>,
    %24 = vector.extract_strided_slice %12 {offsets = [0, 16], sizes = [8, 8], strides = [1, 1]} : vector<8x32xf32> to vector<8x8xf32>
    %c16_18 = arith.constant 16 : index
    %c0_19 = arith.constant 0 : index
    %25 = vector.load %arg13[%c16_18, %c0_19] : memref<32x8xf32, #tpu.memory_space<vmem>>, vector<8x8xf32>
    tpu.vector_store %arg13[%c16_18, %c0_19], %24 {strides = array<i32>} : memref<32x8xf32, #tpu.memory_space<vmem>>, vector<8x8xf32>,
    %26 = vector.extract_strided_slice %11 {offsets = [0, 24], sizes = [8, 8], strides = [1, 1]} : vector<8x32xf32> to vector<8x8xf32>
    %c24 = arith.constant 24 : index
    %c0_20 = arith.constant 0 : index
    %27 = vector.load %arg12[%c24, %c0_20] : memref<32x8xf32, #tpu.memory_space<vmem>>, vector<8x8xf32>
    tpu.vector_store %arg12[%c24, %c0_20], %26 {strides = array<i32>} : memref<32x8xf32, #tpu.memory_space<vmem>>, vector<8x8xf32>,
    %28 = vector.extract_strided_slice %12 {offsets = [0, 24], sizes = [8, 8], strides = [1, 1]} : vector<8x32xf32> to vector<8x8xf32>
    %c24_21 = arith.constant 24 : index
    %c0_22 = arith.constant 0 : index
    %29 = vector.load %arg13[%c24_21, %c0_22] : memref<32x8xf32, #tpu.memory_space<vmem>>, vector<8x8xf32>
    tpu.vector_store %arg13[%c24_21, %c0_22], %28 {strides = array<i32>} : memref<32x8xf32, #tpu.memory_space<vmem>>, vector<8x8xf32>,
    %c0_23 = arith.constant 0 : index
    %c0_24 = arith.constant 0 : index
    %30 = vector.load %arg12[%c0_23, %c0_24] : memref<32x8xf32, #tpu.memory_space<vmem>>, vector<32x8xf32>
    %c0_25 = arith.constant 0 : index
    %c0_26 = arith.constant 0 : index
    %31 = vector.load %arg13[%c0_25, %c0_26] : memref<32x8xf32, #tpu.memory_space<vmem>>, vector<32x8xf32>
    %cst_27 = arith.constant dense<0.000000e+00> : vector<32x32xf32>
    %32 = tpu.matmul %30, %31, %cst_27 {dimension_numbers = #tpu.dot_dimension_numbers<[1], [1], [0], [0], [0, 0, 1, 0], [], []>} : vector<32x8xf32>, vector<32x8xf32>, vector<32x32xf32> -> vector<32x32xf32>
    %cst_28 = arith.constant 3.125000e-02 : f32
    %33 = vector.broadcast %cst_28 : f32 to vector<32x32xf32>
    %34 = arith.mulf %32, %33 : vector<32x32xf32>
    %35 = arith.addf %34, %2 : vector<32x32xf32>
    %cst_29 = arith.constant dense<0xFF800000> : vector<32xf32>
    %36 = vector.multi_reduction <maximumf>, %35, %cst_29 [0] : vector<32x32xf32> to vector<32xf32>
    %37 = vector.shape_cast %36 : vector<32xf32> to vector<1x32xf32>
    %38 = vector.broadcast %37 : vector<1x32xf32> to vector<32x32xf32>
    %39 = arith.subf %35, %38 : vector<32x32xf32>
    %40 = math.exp %39 : vector<32x32xf32>
    %cst_30 = arith.constant dense<0.000000e+00> : vector<32xf32>
    %41 = vector.multi_reduction <add>, %40, %cst_30 [0] : vector<32x32xf32> to vector<32xf32>
    %42 = vector.shape_cast %41 : vector<32xf32> to vector<1x32xf32>
    %43 = tpu.reciprocal %42 {approx = true} : vector<1x32xf32> -> vector<1x32xf32>
    %44 = vector.broadcast %43 : vector<1x32xf32> to vector<32x32xf32>
    %45 = arith.mulf %40, %44 : vector<32x32xf32>
    %cst_31 = arith.constant dense<0.000000e+00> : vector<32xf32>
    %46 = vector.multi_reduction <add>, %45, %cst_31 [1] : vector<32x32xf32> to vector<32xf32>
    %47 = vector.shape_cast %46 : vector<32xf32> to vector<32x1xf32>
    %cst_32 = arith.constant 0.000000e+00 : f32
    %48 = vector.broadcast %cst_32 : f32 to vector<8x32xf32>
    %c0_i32 = arith.constant 0 : i32
    %49 = vector.broadcast %c0_i32 : i32 to vector<8x32xi32>
    %50 = arith.cmpi sge, %3, %49 : vector<8x32xi32>
    %c8_i32 = arith.constant 8 : i32
    %51 = vector.broadcast %c8_i32 : i32 to vector<8x32xi32>
    %52 = arith.cmpi slt, %3, %51 : vector<8x32xi32>
    %53 = arith.andi %50, %52 : vector<8x32xi1>
    %54 = vector.extract_strided_slice %47 {offsets = [0, 0], sizes = [8, 1], strides = [1, 1]} : vector<32x1xf32> to vector<8x1xf32>
    %55 = vector.shape_cast %54 : vector<8x1xf32> to vector<8x1xf32>
    %56 = vector.broadcast %55 : vector<8x1xf32> to vector<8x32xf32>
    %57 = arith.select %53, %56, %48 : vector<8x32xi1>, vector<8x32xf32>
    %c8_i32_33 = arith.constant 8 : i32
    %58 = vector.broadcast %c8_i32_33 : i32 to vector<8x32xi32>
    %59 = arith.cmpi sge, %3, %58 : vector<8x32xi32>
    %c16_i32 = arith.constant 16 : i32
    %60 = vector.broadcast %c16_i32 : i32 to vector<8x32xi32>
    %61 = arith.cmpi slt, %3, %60 : vector<8x32xi32>
    %62 = arith.andi %59, %61 : vector<8x32xi1>
    %63 = vector.extract_strided_slice %47 {offsets = [8, 0], sizes = [8, 1], strides = [1, 1]} : vector<32x1xf32> to vector<8x1xf32>
    %64 = vector.shape_cast %63 : vector<8x1xf32> to vector<8x1xf32>
    %65 = vector.broadcast %64 : vector<8x1xf32> to vector<8x32xf32>
    %66 = arith.select %62, %65, %57 : vector<8x32xi1>, vector<8x32xf32>
    %c16_i32_34 = arith.constant 16 : i32
    %67 = vector.broadcast %c16_i32_34 : i32 to vector<8x32xi32>
    %68 = arith.cmpi sge, %3, %67 : vector<8x32xi32>
    %c24_i32 = arith.constant 24 : i32
    %69 = vector.broadcast %c24_i32 : i32 to vector<8x32xi32>
    %70 = arith.cmpi slt, %3, %69 : vector<8x32xi32>
    %71 = arith.andi %68, %70 : vector<8x32xi1>
    %72 = vector.extract_strided_slice %47 {offsets = [16, 0], sizes = [8, 1], strides = [1, 1]} : vector<32x1xf32> to vector<8x1xf32>
    %73 = vector.shape_cast %72 : vector<8x1xf32> to vector<8x1xf32>
    %74 = vector.broadcast %73 : vector<8x1xf32> to vector<8x32xf32>
    %75 = arith.select %71, %74, %66 : vector<8x32xi1>, vector<8x32xf32>
    %c24_i32_35 = arith.constant 24 : i32
    %76 = vector.broadcast %c24_i32_35 : i32 to vector<8x32xi32>
    %77 = arith.cmpi sge, %3, %76 : vector<8x32xi32>
    %c32_i32 = arith.constant 32 : i32
    %78 = vector.broadcast %c32_i32 : i32 to vector<8x32xi32>
    %79 = arith.cmpi slt, %3, %78 : vector<8x32xi32>
    %80 = arith.andi %77, %79 : vector<8x32xi1>
    %81 = vector.extract_strided_slice %47 {offsets = [24, 0], sizes = [8, 1], strides = [1, 1]} : vector<32x1xf32> to vector<8x1xf32>
    %82 = vector.shape_cast %81 : vector<8x1xf32> to vector<8x1xf32>
    %83 = vector.broadcast %82 : vector<8x1xf32> to vector<8x32xf32>
    %84 = arith.select %80, %83, %75 : vector<8x32xi1>, vector<8x32xf32>
    %85 = arith.mulf %13, %84 : vector<8x32xf32>
    %c0_36 = arith.constant 0 : index
    %c0_37 = arith.constant 0 : index
    %c0_38 = arith.constant 0 : index
    %86 = vector.load %arg5[%c0_36, %c0_37, %c0_38] : memref<2x32x32xf32, #tpu.memory_space<vmem>>, vector<1x32x32xf32>
    %87 = vector.shape_cast %86 : vector<1x32x32xf32> to vector<32x32xf32>
    %cst_39 = arith.constant dense<0.000000e+00> : vector<8x32xf32>
    %88 = tpu.matmul %85, %87, %cst_39 {dimension_numbers = #tpu.dot_dimension_numbers<[1], [0], [0], [1], [0, 0, 1, 1], [], []>} : vector<8x32xf32>, vector<32x32xf32>, vector<8x32xf32> -> vector<8x32xf32>
    %c0_40 = arith.constant 0 : index
    %c0_41 = arith.constant 0 : index
    %c0_42 = arith.constant 0 : index
    %89 = vector.load %arg6[%c0_40, %c0_41, %c0_42] : memref<2x1x32xf32, #tpu.memory_space<vmem>>, vector<1x1x32xf32>
    %90 = vector.shape_cast %89 : vector<1x1x32xf32> to vector<1x32xf32>
    %91 = vector.broadcast %90 : vector<1x32xf32> to vector<8x32xf32>
    %92 = arith.addf %88, %91 : vector<8x32xf32>
    %93 = arith.addf %92, %1 : vector<8x32xf32>
    %cst_43 = arith.constant dense<0.000000e+00> : vector<8xf32>
    %94 = vector.multi_reduction <add>, %93, %cst_43 [1] : vector<8x32xf32> to vector<8xf32>
    %95 = vector.shape_cast %94 : vector<8xf32> to vector<8x1xf32>
    %cst_44 = arith.constant 3.200000e+01 : f32
    %96 = vector.broadcast %cst_44 : f32 to vector<8x1xf32>
    %97 = arith.divf %95, %96 : vector<8x1xf32>
    %98 = vector.broadcast %97 : vector<8x1xf32> to vector<8x32xf32>
    %99 = arith.subf %93, %98 : vector<8x32xf32>
    %100 = arith.mulf %99, %99 : vector<8x32xf32>
    %cst_45 = arith.constant dense<0.000000e+00> : vector<8xf32>
    %101 = vector.multi_reduction <add>, %100, %cst_45 [1] : vector<8x32xf32> to vector<8xf32>
    %102 = vector.shape_cast %101 : vector<8xf32> to vector<8x1xf32>
    %cst_46 = arith.constant 3.200000e+01 : f32
    %103 = vector.broadcast %cst_46 : f32 to vector<8x1xf32>
    %104 = arith.divf %102, %103 : vector<8x1xf32>
    %105 = vector.broadcast %97 : vector<8x1xf32> to vector<8x32xf32>
    %106 = arith.subf %93, %105 : vector<8x32xf32>
    %cst_47 = arith.constant 9.99999974E-6 : f32
    %107 = vector.broadcast %cst_47 : f32 to vector<8x1xf32>
    %108 = arith.addf %104, %107 : vector<8x1xf32>
    %109 = math.rsqrt %108 : vector<8x1xf32>
    %110 = vector.broadcast %109 : vector<8x1xf32> to vector<8x32xf32>
    %111 = arith.mulf %106, %110 : vector<8x32xf32>
    %c0_48 = arith.constant 0 : index
    %c0_49 = arith.constant 0 : index
    %c0_50 = arith.constant 0 : index
    %112 = vector.load %arg7[%c0_48, %c0_49, %c0_50] : memref<2x1x32xf32, #tpu.memory_space<vmem>>, vector<1x1x32xf32>
    %113 = vector.shape_cast %112 : vector<1x1x32xf32> to vector<1x32xf32>
    %114 = vector.broadcast %113 : vector<1x32xf32> to vector<8x32xf32>
    %115 = arith.mulf %111, %114 : vector<8x32xf32>
    %c0_51 = arith.constant 0 : index
    %c0_52 = arith.constant 0 : index
    %c0_53 = arith.constant 0 : index
    %116 = vector.load %arg8[%c0_51, %c0_52, %c0_53] : memref<2x1x32xf32, #tpu.memory_space<vmem>>, vector<1x1x32xf32>
    %117 = vector.shape_cast %116 : vector<1x1x32xf32> to vector<1x32xf32>
    %118 = vector.broadcast %117 : vector<1x32xf32> to vector<8x32xf32>
    %119 = arith.addf %115, %118 : vector<8x32xf32>
    %c0_54 = arith.constant 0 : index
    %c0_55 = arith.constant 0 : index
    %c0_56 = arith.constant 0 : index
    %120 = vector.load %arg9[%c0_54, %c0_55, %c0_56] : memref<2x32x32xf32, #tpu.memory_space<vmem>>, vector<1x32x32xf32>
    %121 = vector.shape_cast %120 : vector<1x32x32xf32> to vector<32x32xf32>
    %cst_57 = arith.constant dense<0.000000e+00> : vector<8x32xf32>
    %122 = tpu.matmul %119, %121, %cst_57 {dimension_numbers = #tpu.dot_dimension_numbers<[1], [0], [0], [1], [0, 0, 1, 1], [], []>} : vector<8x32xf32>, vector<32x32xf32>, vector<8x32xf32> -> vector<8x32xf32>
    %c0_58 = arith.constant 0 : index
    %c0_59 = arith.constant 0 : index
    %c0_60 = arith.constant 0 : index
    %123 = vector.load %arg10[%c0_58, %c0_59, %c0_60] : memref<2x1x32xf32, #tpu.memory_space<vmem>>, vector<1x1x32xf32>
    %124 = vector.shape_cast %123 : vector<1x1x32xf32> to vector<1x32xf32>
    %125 = vector.broadcast %124 : vector<1x32xf32> to vector<8x32xf32>
    %126 = arith.addf %122, %125 : vector<8x32xf32>
    %127 = arith.addf %126, %119 : vector<8x32xf32>
    %c1 = arith.constant 1 : index
    %c0_61 = arith.constant 0 : index
    %c0_62 = arith.constant 0 : index
    %128 = vector.load %arg3[%c1, %c0_61, %c0_62] : memref<2x32x96xf32, #tpu.memory_space<vmem>>, vector<1x32x96xf32>
    %129 = vector.shape_cast %128 : vector<1x32x96xf32> to vector<32x96xf32>
    %cst_63 = arith.constant dense<0.000000e+00> : vector<8x96xf32>
    %130 = tpu.matmul %127, %129, %cst_63 {dimension_numbers = #tpu.dot_dimension_numbers<[1], [0], [0], [1], [0, 0, 1, 1], [], []>} : vector<8x32xf32>, vector<32x96xf32>, vector<8x96xf32> -> vector<8x96xf32>
    %c1_64 = arith.constant 1 : index
    %c0_65 = arith.constant 0 : index
    %c0_66 = arith.constant 0 : index
    %131 = vector.load %arg4[%c1_64, %c0_65, %c0_66] : memref<2x1x96xf32, #tpu.memory_space<vmem>>, vector<1x1x96xf32>
    %132 = vector.shape_cast %131 : vector<1x1x96xf32> to vector<1x96xf32>
    %133 = vector.broadcast %132 : vector<1x96xf32> to vector<8x96xf32>
    %134 = arith.addf %130, %133 : vector<8x96xf32>
    %135 = vector.extract_strided_slice %134 {offsets = [0, 0], sizes = [8, 32], strides = [1, 1]} : vector<8x96xf32> to vector<8x32xf32>
    %136 = vector.extract_strided_slice %134 {offsets = [0, 32], sizes = [8, 32], strides = [1, 1]} : vector<8x96xf32> to vector<8x32xf32>
    %137 = vector.extract_strided_slice %134 {offsets = [0, 64], sizes = [8, 32], strides = [1, 1]} : vector<8x96xf32> to vector<8x32xf32>
    %138 = vector.extract_strided_slice %135 {offsets = [0, 0], sizes = [8, 8], strides = [1, 1]} : vector<8x32xf32> to vector<8x8xf32>
    %c0_67 = arith.constant 0 : index
    %c0_68 = arith.constant 0 : index
    %139 = vector.load %arg12[%c0_67, %c0_68] : memref<32x8xf32, #tpu.memory_space<vmem>>, vector<8x8xf32>
    tpu.vector_store %arg12[%c0_67, %c0_68], %138 {strides = array<i32>} : memref<32x8xf32, #tpu.memory_space<vmem>>, vector<8x8xf32>,
    %140 = vector.extract_strided_slice %136 {offsets = [0, 0], sizes = [8, 8], strides = [1, 1]} : vector<8x32xf32> to vector<8x8xf32>
    %c0_69 = arith.constant 0 : index
    %c0_70 = arith.constant 0 : index
    %141 = vector.load %arg13[%c0_69, %c0_70] : memref<32x8xf32, #tpu.memory_space<vmem>>, vector<8x8xf32>
    tpu.vector_store %arg13[%c0_69, %c0_70], %140 {strides = array<i32>} : memref<32x8xf32, #tpu.memory_space<vmem>>, vector<8x8xf32>,
    %142 = vector.extract_strided_slice %135 {offsets = [0, 8], sizes = [8, 8], strides = [1, 1]} : vector<8x32xf32> to vector<8x8xf32>
    %c8_71 = arith.constant 8 : index
    %c0_72 = arith.constant 0 : index
    %143 = vector.load %arg12[%c8_71, %c0_72] : memref<32x8xf32, #tpu.memory_space<vmem>>, vector<8x8xf32>
    tpu.vector_store %arg12[%c8_71, %c0_72], %142 {strides = array<i32>} : memref<32x8xf32, #tpu.memory_space<vmem>>, vector<8x8xf32>,
    %144 = vector.extract_strided_slice %136 {offsets = [0, 8], sizes = [8, 8], strides = [1, 1]} : vector<8x32xf32> to vector<8x8xf32>
    %c8_73 = arith.constant 8 : index
    %c0_74 = arith.constant 0 : index
    %145 = vector.load %arg13[%c8_73, %c0_74] : memref<32x8xf32, #tpu.memory_space<vmem>>, vector<8x8xf32>
    tpu.vector_store %arg13[%c8_73, %c0_74], %144 {strides = array<i32>} : memref<32x8xf32, #tpu.memory_space<vmem>>, vector<8x8xf32>,
    %146 = vector.extract_strided_slice %135 {offsets = [0, 16], sizes = [8, 8], strides = [1, 1]} : vector<8x32xf32> to vector<8x8xf32>
    %c16_75 = arith.constant 16 : index
    %c0_76 = arith.constant 0 : index
    %147 = vector.load %arg12[%c16_75, %c0_76] : memref<32x8xf32, #tpu.memory_space<vmem>>, vector<8x8xf32>
    tpu.vector_store %arg12[%c16_75, %c0_76], %146 {strides = array<i32>} : memref<32x8xf32, #tpu.memory_space<vmem>>, vector<8x8xf32>,
    %148 = vector.extract_strided_slice %136 {offsets = [0, 16], sizes = [8, 8], strides = [1, 1]} : vector<8x32xf32> to vector<8x8xf32>
    %c16_77 = arith.constant 16 : index
    %c0_78 = arith.constant 0 : index
    %149 = vector.load %arg13[%c16_77, %c0_78] : memref<32x8xf32, #tpu.memory_space<vmem>>, vector<8x8xf32>
    tpu.vector_store %arg13[%c16_77, %c0_78], %148 {strides = array<i32>} : memref<32x8xf32, #tpu.memory_space<vmem>>, vector<8x8xf32>,
    %150 = vector.extract_strided_slice %135 {offsets = [0, 24], sizes = [8, 8], strides = [1, 1]} : vector<8x32xf32> to vector<8x8xf32>
    %c24_79 = arith.constant 24 : index
    %c0_80 = arith.constant 0 : index
    %151 = vector.load %arg12[%c24_79, %c0_80] : memref<32x8xf32, #tpu.memory_space<vmem>>, vector<8x8xf32>
    tpu.vector_store %arg12[%c24_79, %c0_80], %150 {strides = array<i32>} : memref<32x8xf32, #tpu.memory_space<vmem>>, vector<8x8xf32>,
    %152 = vector.extract_strided_slice %136 {offsets = [0, 24], sizes = [8, 8], strides = [1, 1]} : vector<8x32xf32> to vector<8x8xf32>
    %c24_81 = arith.constant 24 : index
    %c0_82 = arith.constant 0 : index
    %153 = vector.load %arg13[%c24_81, %c0_82] : memref<32x8xf32, #tpu.memory_space<vmem>>, vector<8x8xf32>
    tpu.vector_store %arg13[%c24_81, %c0_82], %152 {strides = array<i32>} : memref<32x8xf32, #tpu.memory_space<vmem>>, vector<8x8xf32>,
    %c0_83 = arith.constant 0 : index
    %c0_84 = arith.constant 0 : index
    %154 = vector.load %arg12[%c0_83, %c0_84] : memref<32x8xf32, #tpu.memory_space<vmem>>, vector<32x8xf32>
    %c0_85 = arith.constant 0 : index
    %c0_86 = arith.constant 0 : index
    %155 = vector.load %arg13[%c0_85, %c0_86] : memref<32x8xf32, #tpu.memory_space<vmem>>, vector<32x8xf32>
    %cst_87 = arith.constant dense<0.000000e+00> : vector<32x32xf32>
    %156 = tpu.matmul %154, %155, %cst_87 {dimension_numbers = #tpu.dot_dimension_numbers<[1], [1], [0], [0], [0, 0, 1, 0], [], []>} : vector<32x8xf32>, vector<32x8xf32>, vector<32x32xf32> -> vector<32x32xf32>
    %cst_88 = arith.constant 3.125000e-02 : f32
    %157 = vector.broadcast %cst_88 : f32 to vector<32x32xf32>
    %158 = arith.mulf %156, %157 : vector<32x32xf32>
    %159 = arith.addf %158, %2 : vector<32x32xf32>
    %cst_89 = arith.constant dense<0xFF800000> : vector<32xf32>
    %160 = vector.multi_reduction <maximumf>, %159, %cst_89 [0] : vector<32x32xf32> to vector<32xf32>
    %161 = vector.shape_cast %160 : vector<32xf32> to vector<1x32xf32>
    %162 = vector.broadcast %161 : vector<1x32xf32> to vector<32x32xf32>
    %163 = arith.subf %159, %162 : vector<32x32xf32>
    %164 = math.exp %163 : vector<32x32xf32>
    %cst_90 = arith.constant dense<0.000000e+00> : vector<32xf32>
    %165 = vector.multi_reduction <add>, %164, %cst_90 [0] : vector<32x32xf32> to vector<32xf32>
    %166 = vector.shape_cast %165 : vector<32xf32> to vector<1x32xf32>
    %167 = tpu.reciprocal %166 {approx = true} : vector<1x32xf32> -> vector<1x32xf32>
    %168 = vector.broadcast %167 : vector<1x32xf32> to vector<32x32xf32>
    %169 = arith.mulf %164, %168 : vector<32x32xf32>
    %cst_91 = arith.constant dense<0.000000e+00> : vector<32xf32>
    %170 = vector.multi_reduction <add>, %169, %cst_91 [1] : vector<32x32xf32> to vector<32xf32>
    %171 = vector.shape_cast %170 : vector<32xf32> to vector<32x1xf32>
    %cst_92 = arith.constant 0.000000e+00 : f32
    %172 = vector.broadcast %cst_92 : f32 to vector<8x32xf32>
    %c0_i32_93 = arith.constant 0 : i32
    %173 = vector.broadcast %c0_i32_93 : i32 to vector<8x32xi32>
    %174 = arith.cmpi sge, %3, %173 : vector<8x32xi32>
    %c8_i32_94 = arith.constant 8 : i32
    %175 = vector.broadcast %c8_i32_94 : i32 to vector<8x32xi32>
    %176 = arith.cmpi slt, %3, %175 : vector<8x32xi32>
    %177 = arith.andi %174, %176 : vector<8x32xi1>
    %178 = vector.extract_strided_slice %171 {offsets = [0, 0], sizes = [8, 1], strides = [1, 1]} : vector<32x1xf32> to vector<8x1xf32>
    %179 = vector.shape_cast %178 : vector<8x1xf32> to vector<8x1xf32>
    %180 = vector.broadcast %179 : vector<8x1xf32> to vector<8x32xf32>
    %181 = arith.select %177, %180, %172 : vector<8x32xi1>, vector<8x32xf32>
    %c8_i32_95 = arith.constant 8 : i32
    %182 = vector.broadcast %c8_i32_95 : i32 to vector<8x32xi32>
    %183 = arith.cmpi sge, %3, %182 : vector<8x32xi32>
    %c16_i32_96 = arith.constant 16 : i32
    %184 = vector.broadcast %c16_i32_96 : i32 to vector<8x32xi32>
    %185 = arith.cmpi slt, %3, %184 : vector<8x32xi32>
    %186 = arith.andi %183, %185 : vector<8x32xi1>
    %187 = vector.extract_strided_slice %171 {offsets = [8, 0], sizes = [8, 1], strides = [1, 1]} : vector<32x1xf32> to vector<8x1xf32>
    %188 = vector.shape_cast %187 : vector<8x1xf32> to vector<8x1xf32>
    %189 = vector.broadcast %188 : vector<8x1xf32> to vector<8x32xf32>
    %190 = arith.select %186, %189, %181 : vector<8x32xi1>, vector<8x32xf32>
    %c16_i32_97 = arith.constant 16 : i32
    %191 = vector.broadcast %c16_i32_97 : i32 to vector<8x32xi32>
    %192 = arith.cmpi sge, %3, %191 : vector<8x32xi32>
    %c24_i32_98 = arith.constant 24 : i32
    %193 = vector.broadcast %c24_i32_98 : i32 to vector<8x32xi32>
    %194 = arith.cmpi slt, %3, %193 : vector<8x32xi32>
    %195 = arith.andi %192, %194 : vector<8x32xi1>
    %196 = vector.extract_strided_slice %171 {offsets = [16, 0], sizes = [8, 1], strides = [1, 1]} : vector<32x1xf32> to vector<8x1xf32>
    %197 = vector.shape_cast %196 : vector<8x1xf32> to vector<8x1xf32>
    %198 = vector.broadcast %197 : vector<8x1xf32> to vector<8x32xf32>
    %199 = arith.select %195, %198, %190 : vector<8x32xi1>, vector<8x32xf32>
    %c24_i32_99 = arith.constant 24 : i32
    %200 = vector.broadcast %c24_i32_99 : i32 to vector<8x32xi32>
    %201 = arith.cmpi sge, %3, %200 : vector<8x32xi32>
    %c32_i32_100 = arith.constant 32 : i32
    %202 = vector.broadcast %c32_i32_100 : i32 to vector<8x32xi32>
    %203 = arith.cmpi slt, %3, %202 : vector<8x32xi32>
    %204 = arith.andi %201, %203 : vector<8x32xi1>
    %205 = vector.extract_strided_slice %171 {offsets = [24, 0], sizes = [8, 1], strides = [1, 1]} : vector<32x1xf32> to vector<8x1xf32>
    %206 = vector.shape_cast %205 : vector<8x1xf32> to vector<8x1xf32>
    %207 = vector.broadcast %206 : vector<8x1xf32> to vector<8x32xf32>
    %208 = arith.select %204, %207, %199 : vector<8x32xi1>, vector<8x32xf32>
    %209 = arith.mulf %137, %208 : vector<8x32xf32>
    %c1_101 = arith.constant 1 : index
    %c0_102 = arith.constant 0 : index
    %c0_103 = arith.constant 0 : index
    %210 = vector.load %arg5[%c1_101, %c0_102, %c0_103] : memref<2x32x32xf32, #tpu.memory_space<vmem>>, vector<1x32x32xf32>
    %211 = vector.shape_cast %210 : vector<1x32x32xf32> to vector<32x32xf32>
    %cst_104 = arith.constant dense<0.000000e+00> : vector<8x32xf32>
    %212 = tpu.matmul %209, %211, %cst_104 {dimension_numbers = #tpu.dot_dimension_numbers<[1], [0], [0], [1], [0, 0, 1, 1], [], []>} : vector<8x32xf32>, vector<32x32xf32>, vector<8x32xf32> -> vector<8x32xf32>
    %c1_105 = arith.constant 1 : index
    %c0_106 = arith.constant 0 : index
    %c0_107 = arith.constant 0 : index
    %213 = vector.load %arg6[%c1_105, %c0_106, %c0_107] : memref<2x1x32xf32, #tpu.memory_space<vmem>>, vector<1x1x32xf32>
    %214 = vector.shape_cast %213 : vector<1x1x32xf32> to vector<1x32xf32>
    %215 = vector.broadcast %214 : vector<1x32xf32> to vector<8x32xf32>
    %216 = arith.addf %212, %215 : vector<8x32xf32>
    %217 = arith.addf %216, %127 : vector<8x32xf32>
    %cst_108 = arith.constant dense<0.000000e+00> : vector<8xf32>
    %218 = vector.multi_reduction <add>, %217, %cst_108 [1] : vector<8x32xf32> to vector<8xf32>
    %219 = vector.shape_cast %218 : vector<8xf32> to vector<8x1xf32>
    %cst_109 = arith.constant 3.200000e+01 : f32
    %220 = vector.broadcast %cst_109 : f32 to vector<8x1xf32>
    %221 = arith.divf %219, %220 : vector<8x1xf32>
    %222 = vector.broadcast %221 : vector<8x1xf32> to vector<8x32xf32>
    %223 = arith.subf %217, %222 : vector<8x32xf32>
    %224 = arith.mulf %223, %223 : vector<8x32xf32>
    %cst_110 = arith.constant dense<0.000000e+00> : vector<8xf32>
    %225 = vector.multi_reduction <add>, %224, %cst_110 [1] : vector<8x32xf32> to vector<8xf32>
    %226 = vector.shape_cast %225 : vector<8xf32> to vector<8x1xf32>
    %cst_111 = arith.constant 3.200000e+01 : f32
    %227 = vector.broadcast %cst_111 : f32 to vector<8x1xf32>
    %228 = arith.divf %226, %227 : vector<8x1xf32>
    %229 = vector.broadcast %221 : vector<8x1xf32> to vector<8x32xf32>
    %230 = arith.subf %217, %229 : vector<8x32xf32>
    %cst_112 = arith.constant 9.99999974E-6 : f32
    %231 = vector.broadcast %cst_112 : f32 to vector<8x1xf32>
    %232 = arith.addf %228, %231 : vector<8x1xf32>
    %233 = math.rsqrt %232 : vector<8x1xf32>
    %234 = vector.broadcast %233 : vector<8x1xf32> to vector<8x32xf32>
    %235 = arith.mulf %230, %234 : vector<8x32xf32>
    %c1_113 = arith.constant 1 : index
    %c0_114 = arith.constant 0 : index
    %c0_115 = arith.constant 0 : index
    %236 = vector.load %arg7[%c1_113, %c0_114, %c0_115] : memref<2x1x32xf32, #tpu.memory_space<vmem>>, vector<1x1x32xf32>
    %237 = vector.shape_cast %236 : vector<1x1x32xf32> to vector<1x32xf32>
    %238 = vector.broadcast %237 : vector<1x32xf32> to vector<8x32xf32>
    %239 = arith.mulf %235, %238 : vector<8x32xf32>
    %c1_116 = arith.constant 1 : index
    %c0_117 = arith.constant 0 : index
    %c0_118 = arith.constant 0 : index
    %240 = vector.load %arg8[%c1_116, %c0_117, %c0_118] : memref<2x1x32xf32, #tpu.memory_space<vmem>>, vector<1x1x32xf32>
    %241 = vector.shape_cast %240 : vector<1x1x32xf32> to vector<1x32xf32>
    %242 = vector.broadcast %241 : vector<1x32xf32> to vector<8x32xf32>
    %243 = arith.addf %239, %242 : vector<8x32xf32>
    %c1_119 = arith.constant 1 : index
    %c0_120 = arith.constant 0 : index
    %c0_121 = arith.constant 0 : index
    %244 = vector.load %arg9[%c1_119, %c0_120, %c0_121] : memref<2x32x32xf32, #tpu.memory_space<vmem>>, vector<1x32x32xf32>
    %245 = vector.shape_cast %244 : vector<1x32x32xf32> to vector<32x32xf32>
    %cst_122 = arith.constant dense<0.000000e+00> : vector<8x32xf32>
    %246 = tpu.matmul %243, %245, %cst_122 {dimension_numbers = #tpu.dot_dimension_numbers<[1], [0], [0], [1], [0, 0, 1, 1], [], []>} : vector<8x32xf32>, vector<32x32xf32>, vector<8x32xf32> -> vector<8x32xf32>
    %c1_123 = arith.constant 1 : index
    %c0_124 = arith.constant 0 : index
    %c0_125 = arith.constant 0 : index
    %247 = vector.load %arg10[%c1_123, %c0_124, %c0_125] : memref<2x1x32xf32, #tpu.memory_space<vmem>>, vector<1x1x32xf32>
    %248 = vector.shape_cast %247 : vector<1x1x32xf32> to vector<1x32xf32>
    %249 = vector.broadcast %248 : vector<1x32xf32> to vector<8x32xf32>
    %250 = arith.addf %246, %249 : vector<8x32xf32>
    %251 = arith.addf %250, %243 : vector<8x32xf32>
    %c0_126 = arith.constant 0 : index
    %c0_127 = arith.constant 0 : index
    %c0_128 = arith.constant 0 : index
    %252 = vector.load %arg11[%c0_126, %c0_127, %c0_128] : memref<1x8x32xf32, #tpu.memory_space<vmem>>, vector<1x8x32xf32>
    %253 = vector.shape_cast %252 : vector<1x8x32xf32> to vector<8x32xf32>
    %254 = vector.shape_cast %251 : vector<8x32xf32> to vector<1x8x32xf32>
    tpu.vector_store %arg11[%c0_126, %c0_127, %c0_128], %254 {strides = array<i32>} : memref<1x8x32xf32, #tpu.memory_space<vmem>>, vector<1x8x32xf32>,
    return
  }
  func.func @transform_0(%arg0: i32) -> (i32, i32, i32) {
    %c0_i32 = arith.constant 0 : i32
    %c0_i32_0 = arith.constant 0 : i32
    %c0_i32_1 = arith.constant 0 : i32
    return %arg0, %c0_i32, %c0_i32_0 : i32, i32, i32
  }
  func.func @transform_1(%arg0: i32) -> (i32, i32) {
    %c0_i32 = arith.constant 0 : i32
    %c0_i32_0 = arith.constant 0 : i32
    %c0_i32_1 = arith.constant 0 : i32
    return %c0_i32, %c0_i32_0 : i32, i32
  }
  func.func @transform_2(%arg0: i32) -> (i32, i32, i32) {
    %c0_i32 = arith.constant 0 : i32
    %c0_i32_0 = arith.constant 0 : i32
    %c0_i32_1 = arith.constant 0 : i32
    %c0_i32_2 = arith.constant 0 : i32
    return %c0_i32, %c0_i32_0, %c0_i32_1 : i32, i32, i32
  }
  func.func @transform_3(%arg0: i32) -> (i32, i32, i32) {
    %c0_i32 = arith.constant 0 : i32
    %c0_i32_0 = arith.constant 0 : i32
    %c0_i32_1 = arith.constant 0 : i32
    %c0_i32_2 = arith.constant 0 : i32
    return %c0_i32, %c0_i32_0, %c0_i32_1 : i32, i32, i32
  }
  func.func @transform_4(%arg0: i32) -> (i32, i32, i32) {
    %c0_i32 = arith.constant 0 : i32
    %c0_i32_0 = arith.constant 0 : i32
    %c0_i32_1 = arith.constant 0 : i32
    %c0_i32_2 = arith.constant 0 : i32
    return %c0_i32, %c0_i32_0, %c0_i32_1 : i32, i32, i32
  }
  func.func @transform_5(%arg0: i32) -> (i32, i32, i32) {
    %c0_i32 = arith.constant 0 : i32
    %c0_i32_0 = arith.constant 0 : i32
    %c0_i32_1 = arith.constant 0 : i32
    %c0_i32_2 = arith.constant 0 : i32
    return %c0_i32, %c0_i32_0, %c0_i32_1 : i32, i32, i32
  }
  func.func @transform_6(%arg0: i32) -> (i32, i32, i32) {
    %c0_i32 = arith.constant 0 : i32
    %c0_i32_0 = arith.constant 0 : i32
    %c0_i32_1 = arith.constant 0 : i32
    %c0_i32_2 = arith.constant 0 : i32
    return %c0_i32, %c0_i32_0, %c0_i32_1 : i32, i32, i32
  }
  func.func @transform_7(%arg0: i32) -> (i32, i32, i32) {
    %c0_i32 = arith.constant 0 : i32
    %c0_i32_0 = arith.constant 0 : i32
    %c0_i32_1 = arith.constant 0 : i32
    %c0_i32_2 = arith.constant 0 : i32
    return %c0_i32, %c0_i32_0, %c0_i32_1 : i32, i32, i32
  }
  func.func @transform_8(%arg0: i32) -> (i32, i32, i32) {
    %c0_i32 = arith.constant 0 : i32
    %c0_i32_0 = arith.constant 0 : i32
    %c0_i32_1 = arith.constant 0 : i32
    %c0_i32_2 = arith.constant 0 : i32
    return %c0_i32, %c0_i32_0, %c0_i32_1 : i32, i32, i32
  }
  func.func @transform_9(%arg0: i32) -> (i32, i32, i32) {
    %c0_i32 = arith.constant 0 : i32
    %c0_i32_0 = arith.constant 0 : i32
    %c0_i32_1 = arith.constant 0 : i32
    %c0_i32_2 = arith.constant 0 : i32
    return %c0_i32, %c0_i32_0, %c0_i32_1 : i32, i32, i32
  }
  func.func @transform_10(%arg0: i32) -> (i32, i32, i32) {
    %c0_i32 = arith.constant 0 : i32
    %c0_i32_0 = arith.constant 0 : i32
    %c0_i32_1 = arith.constant 0 : i32
    return %arg0, %c0_i32, %c0_i32_0 : i32, i32, i32
  }
}

</mosaic_0001>

<llo_original>
// kernel: tpu_custom_call.1
$region0: #{tpu_custom_call.1}
  #allocation0 [shape = 'u32[]', space=smem, size = 0x4, offset = 0x4, fixed_abs, tag = 'smem constant byte address 0x4 - core index']
  #allocation1 [shape = 'u32[72,128]{1,0:T(1,128)}', space=vmem, size = 0x9000, scoped, tag = 'internal scratch']
  #allocation2 [shape = 'f32[32,8]{1,0:T(8,128)}', space=vmem, size = 0x4000, scoped, tag = 'scratch operand']
  #allocation3 [shape = 'f32[32,8]{1,0:T(8,128)}', space=vmem, size = 0x4000, scoped, tag = 'scratch operand']
  %s0 = inlined_call_operand.hbm [shape: f32[2,8,32], index: 0, kind: input, shape index: {}]
  %s1 = inlined_call_operand.hbm [shape: f32[32,32], index: 1, kind: input, shape index: {}]
  %s2 = inlined_call_operand.hbm [shape: f32[2,32,96], index: 2, kind: input, shape index: {}]
  %s3 = inlined_call_operand.vmem [shape: f32[2,1,96], index: 3, kind: input, shape index: {}]
  %s4 = inlined_call_operand.hbm [shape: f32[2,32,32], index: 4, kind: input, shape index: {}]
  %s5 = inlined_call_operand.vmem [shape: f32[2,1,32], index: 5, kind: input, shape index: {}]
  %s6 = inlined_call_operand.hbm [shape: f32[2,1,32], index: 6, kind: input, shape index: {}]
  %s7 = inlined_call_operand.vmem [shape: f32[2,1,32], index: 7, kind: input, shape index: {}]
  %s8 = inlined_call_operand.hbm [shape: f32[2,32,32], index: 8, kind: input, shape index: {}]
  %s9 = inlined_call_operand.vmem [shape: f32[2,1,32], index: 9, kind: input, shape index: {}]
  %s10 = inlined_call_operand.hbm [shape: f32[2,8,32], index: 10, kind: output, shape index: {}]
  %s11 = sld [smem:[#allocation0]]
  $region97: #{tpu_custom_call.1} parent=0
    _
  %s13 = ssub.s32 1, %s11
  %s14 = scalar_select 0, %s13, %s11
  $region1: #{tpu_custom_call.1} parent=0
    #allocation4 [shape = 'u8[8192]{0}', space=vmem, size = 0x2000, scoped, tag = 'input window, operand 0']
    #allocation5 [shape = 's32[2]{0}', space=sflag, size = 0x8, scoped, tag = 'scoped memory for tpu_custom_call.1']
    #allocation6 [shape = 's32[2]{0}', space=sflag, size = 0x8, scoped, tag = 'scoped memory for tpu_custom_call.1']
    #allocation7 [shape = 'u8[16384]{0}', space=vmem, size = 0x4000, scoped, tag = 'input window, operand 1, single buffered']
    #allocation8 [shape = 's32[1]{0}', space=sflag, size = 0x4, scoped, tag = 'scoped memory for tpu_custom_call.1']
    #allocation9 [shape = 'u8[32768]{0}', space=vmem, size = 0x8000, scoped, tag = 'input window, operand 2, single buffered']
    #allocation10 [shape = 'u8[32768]{0}', space=vmem, size = 0x8000, scoped, tag = 'input window, operand 4, single buffered']
    #allocation11 [shape = 's32[1]{0}', space=sflag, size = 0x4, scoped, tag = 'scoped memory for tpu_custom_call.1']
    #allocation12 [shape = 'u8[1024]{0}', space=vmem, size = 0x400, scoped, tag = 'input window, operand 6, single buffered']
    #allocation13 [shape = 'u8[32768]{0}', space=vmem, size = 0x8000, scoped, tag = 'input window, operand 8, single buffered']
    #allocation14 [shape = 's32[1]{0}', space=sflag, size = 0x4, scoped, tag = 'scoped memory for tpu_custom_call.1']
    #allocation15 [shape = 'u8[8192]{0}', space=vmem, size = 0x2000, scoped, tag = 'output window, operand 0']
    %15 = vsyncpa [#allocation5], 0
    %s16 = scalar_lea.sflag [#allocation5], 1
    %17 = vsyncpa %s16, 0
    %18 = vsyncpa [#allocation8], 0
    %19 = vsyncpa [#allocation11], 0
    %20 = vsyncpa [#allocation14], 0
    %21 = vsyncpa [#allocation6], 0
    %s22 = scalar_lea.sflag [#allocation6], 1
    %23 = vsyncpa %s22, 0
    loop: start=0, step=1, limit=4
    $region2: #{tpu_custom_call.1} parent=1 // loop_pre_header
      _
    $region3: #{tpu_custom_call.1} parent=1 // loop_header
      %s25 = sphi 0, %s29
      %p26 = scmp.ge.s32.totalorder %s25, 4
      %s35 = sphi 0, %s37
      %s38 = sphi 0, %s35
      %s39 = sphi 0, %s38
      %s55 = sphi 0, %s39
      %s59 = sphi 0, %s59
      %s61 = sphi 0, %s59
      %s62 = sphi 0, %s61
      %s76 = sphi 0, %s62
      %s80 = sphi 0, %s80
      %s82 = sphi 0, %s80
      %s83 = sphi 0, %s82
      %s97 = sphi 0, %s83
      %s101 = sphi 0, %s101
      %s103 = sphi 0, %s101
      %s104 = sphi 0, %s103
      %s118 = sphi 0, %s104
      %s122 = sphi 0, %s122
      %s124 = sphi 0, %s122
      %s125 = sphi 0, %s124
      %s139 = sphi 0, %s125
      %s143 = sphi 0, %s143
      %s145 = sphi 0, %s143
      %s146 = sphi 0, %s145
      %s160 = sphi 0, %s146
      %s164 = sphi 0, %s164
      %s166 = sphi 0, %s164
      %s167 = sphi 0, %s166
      %s181 = sphi 0, %s167
      %s185 = sphi 0, %s185
      %s187 = sphi 0, %s185
      %s188 = sphi 0, %s187
      %s202 = sphi 0, %s188
      %s206 = sphi 0, %s206
      %s208 = sphi 0, %s206
      %s209 = sphi 0, %s208
      %s223 = sphi 0, %s209
      %s227 = sphi 0, %s227
      %s229 = sphi 0, %s227
      %s230 = sphi 0, %s229
      %s244 = sphi 0, %s230
      %s250 = sphi 0, %s252
      %s253 = sphi 0, %s250
      %s254 = sphi 0, %s253
      %s270 = sphi 0, %s254
    $region4: #{tpu_custom_call.1} parent=1 // loop_header_branch
      %28 = sbr.rel (%p26) target = $region8
    $region5: #{tpu_custom_call.1} parent=1 // loop_body
      %s30 = ssub.s32 %s25, 1
      %s31 = ssub.s32 %s25, 2
      %s32 = sadd.s32 %s25, 1
      %s33 = ssub.s32 %s25, %s32
      %p34 = scmp.eq.s32.totalorder %s33, 0
      %s36 = sadd.s32 %s35, 1
      %s37 = scalar_select %p34, %s35, %s36
      %p40 = pneg %p34
      %p41 = scmp.eq.s32.totalorder %s25, 1
      %p42 = por %p40, %p41
      %p43 = scmp.ne.s32.totalorder %s35, %s38
      %p44 = scmp.eq.s32.totalorder %s25, 0
      %p45 = por %p43, %p44
      %p46 = scmp.ne.s32.totalorder %s35, %s38
      %p47 = scmp.eq.s32.totalorder %s30, 1
      %p48 = por %p46, %p47
      %p49 = scmp.ne.s32.totalorder %s38, %s39
      %p50 = scmp.eq.s32.totalorder %s30, 0
      %p51 = por %p49, %p50
      %p52 = scmp.ne.s32.totalorder %s38, %s39
      %p53 = scmp.eq.s32.totalorder %s31, 1
      %p54 = por %p52, %p53
      %p56 = scmp.ne.s32.totalorder %s39, %s55
      %p57 = scmp.eq.s32.totalorder %s31, 0
      %p58 = por %p56, %p57
      %s60 = sadd.s32 %s59, 1
      %p63 = scmp.eq.s32.totalorder %s25, 1
      %p64 = scmp.ne.s32.totalorder %s59, %s61
      %p65 = scmp.eq.s32.totalorder %s25, 0
      %p66 = por %p64, %p65
      %p67 = scmp.ne.s32.totalorder %s59, %s61
      %p68 = scmp.eq.s32.totalorder %s30, 1
      %p69 = por %p67, %p68
      %p70 = scmp.ne.s32.totalorder %s61, %s62
      %p71 = scmp.eq.s32.totalorder %s30, 0
      %p72 = por %p70, %p71
      %p73 = scmp.ne.s32.totalorder %s61, %s62
      %p74 = scmp.eq.s32.totalorder %s31, 1
      %p75 = por %p73, %p74
      %p77 = scmp.ne.s32.totalorder %s62, %s76
      %p78 = scmp.eq.s32.totalorder %s31, 0
      %p79 = por %p77, %p78
      %s81 = sadd.s32 %s80, 1
      %p84 = scmp.eq.s32.totalorder %s25, 1
      %p85 = scmp.ne.s32.totalorder %s80, %s82
      %p86 = scmp.eq.s32.totalorder %s25, 0
      %p87 = por %p85, %p86
      %p88 = scmp.ne.s32.totalorder %s80, %s82
      %p89 = scmp.eq.s32.totalorder %s30, 1
      %p90 = por %p88, %p89
      %p91 = scmp.ne.s32.totalorder %s82, %s83
      %p92 = scmp.eq.s32.totalorder %s30, 0
      %p93 = por %p91, %p92
      %p94 = scmp.ne.s32.totalorder %s82, %s83
      %p95 = scmp.eq.s32.totalorder %s31, 1
      %p96 = por %p94, %p95
      %p98 = scmp.ne.s32.totalorder %s83, %s97
      %p99 = scmp.eq.s32.totalorder %s31, 0
      %p100 = por %p98, %p99
      %s102 = sadd.s32 %s101, 1
      %p105 = scmp.eq.s32.totalorder %s25, 1
      %p106 = scmp.ne.s32.totalorder %s101, %s103
      %p107 = scmp.eq.s32.totalorder %s25, 0
      %p108 = por %p106, %p107
      %p109 = scmp.ne.s32.totalorder %s101, %s103
      %p110 = scmp.eq.s32.totalorder %s30, 1
      %p111 = por %p109, %p110
      %p112 = scmp.ne.s32.totalorder %s103, %s104
      %p113 = scmp.eq.s32.totalorder %s30, 0
      %p114 = por %p112, %p113
      %p115 = scmp.ne.s32.totalorder %s103, %s104
      %p116 = scmp.eq.s32.totalorder %s31, 1
      %p117 = por %p115, %p116
      %p119 = scmp.ne.s32.totalorder %s104, %s118
      %p120 = scmp.eq.s32.totalorder %s31, 0
      %p121 = por %p119, %p120
      %s123 = sadd.s32 %s122, 1
      %p126 = scmp.eq.s32.totalorder %s25, 1
      %p127 = scmp.ne.s32.totalorder %s122, %s124
      %p128 = scmp.eq.s32.totalorder %s25, 0
      %p129 = por %p127, %p128
      %p130 = scmp.ne.s32.totalorder %s122, %s124
      %p131 = scmp.eq.s32.totalorder %s30, 1
      %p132 = por %p130, %p131
      %p133 = scmp.ne.s32.totalorder %s124, %s125
      %p134 = scmp.eq.s32.totalorder %s30, 0
      %p135 = por %p133, %p134
      %p136 = scmp.ne.s32.totalorder %s124, %s125
      %p137 = scmp.eq.s32.totalorder %s31, 1
      %p138 = por %p136, %p137
      %p140 = scmp.ne.s32.totalorder %s125, %s139
      %p141 = scmp.eq.s32.totalorder %s31, 0
      %p142 = por %p140, %p141
      %s144 = sadd.s32 %s143, 1
      %p147 = scmp.eq.s32.totalorder %s25, 1
      %p148 = scmp.ne.s32.totalorder %s143, %s145
      %p149 = scmp.eq.s32.totalorder %s25, 0
      %p150 = por %p148, %p149
      %p151 = scmp.ne.s32.totalorder %s143, %s145
      %p152 = scmp.eq.s32.totalorder %s30, 1
      %p153 = por %p151, %p152
      %p154 = scmp.ne.s32.totalorder %s145, %s146
      %p155 = scmp.eq.s32.totalorder %s30, 0
      %p156 = por %p154, %p155
      %p157 = scmp.ne.s32.totalorder %s145, %s146
      %p158 = scmp.eq.s32.totalorder %s31, 1
      %p159 = por %p157, %p158
      %p161 = scmp.ne.s32.totalorder %s146, %s160
      %p162 = scmp.eq.s32.totalorder %s31, 0
      %p163 = por %p161, %p162
      %s165 = sadd.s32 %s164, 1
      %p168 = scmp.eq.s32.totalorder %s25, 1
      %p169 = scmp.ne.s32.totalorder %s164, %s166
      %p170 = scmp.eq.s32.totalorder %s25, 0
      %p171 = por %p169, %p170
      %p172 = scmp.ne.s32.totalorder %s164, %s166
      %p173 = scmp.eq.s32.totalorder %s30, 1
      %p174 = por %p172, %p173
      %p175 = scmp.ne.s32.totalorder %s166, %s167
      %p176 = scmp.eq.s32.totalorder %s30, 0
      %p177 = por %p175, %p176
      %p178 = scmp.ne.s32.totalorder %s166, %s167
      %p179 = scmp.eq.s32.totalorder %s31, 1
      %p180 = por %p178, %p179
      %p182 = scmp.ne.s32.totalorder %s167, %s181
      %p183 = scmp.eq.s32.totalorder %s31, 0
      %p184 = por %p182, %p183
      %s186 = sadd.s32 %s185, 1
      %p189 = scmp.eq.s32.totalorder %s25, 1
      %p190 = scmp.ne.s32.totalorder %s185, %s187
      %p191 = scmp.eq.s32.totalorder %s25, 0
      %p192 = por %p190, %p191
      %p193 = scmp.ne.s32.totalorder %s185, %s187
      %p194 = scmp.eq.s32.totalorder %s30, 1
      %p195 = por %p193, %p194
      %p196 = scmp.ne.s32.totalorder %s187, %s188
      %p197 = scmp.eq.s32.totalorder %s30, 0
      %p198 = por %p196, %p197
      %p199 = scmp.ne.s32.totalorder %s187, %s188
      %p200 = scmp.eq.s32.totalorder %s31, 1
      %p201 = por %p199, %p200
      %p203 = scmp.ne.s32.totalorder %s188, %s202
      %p204 = scmp.eq.s32.totalorder %s31, 0
      %p205 = por %p203, %p204
      %s207 = sadd.s32 %s206, 1
      %p210 = scmp.eq.s32.totalorder %s25, 1
      %p211 = scmp.ne.s32.totalorder %s206, %s208
      %p212 = scmp.eq.s32.totalorder %s25, 0
      %p213 = por %p211, %p212
      %p214 = scmp.ne.s32.totalorder %s206, %s208
      %p215 = scmp.eq.s32.totalorder %s30, 1
      %p216 = por %p214, %p215
      %p217 = scmp.ne.s32.totalorder %s208, %s209
      %p218 = scmp.eq.s32.totalorder %s30, 0
      %p219 = por %p217, %p218
      %p220 = scmp.ne.s32.totalorder %s208, %s209
      %p221 = scmp.eq.s32.totalorder %s31, 1
      %p222 = por %p220, %p221
      %p224 = scmp.ne.s32.totalorder %s209, %s223
      %p225 = scmp.eq.s32.totalorder %s31, 0
      %p226 = por %p224, %p225
      %s228 = sadd.s32 %s227, 1
      %p231 = scmp.eq.s32.totalorder %s25, 1
      %p232 = scmp.ne.s32.totalorder %s227, %s229
      %p233 = scmp.eq.s32.totalorder %s25, 0
      %p234 = por %p232, %p233
      %p235 = scmp.ne.s32.totalorder %s227, %s229
      %p236 = scmp.eq.s32.totalorder %s30, 1
      %p237 = por %p235, %p236
      %p238 = scmp.ne.s32.totalorder %s229, %s230
      %p239 = scmp.eq.s32.totalorder %s30, 0
      %p240 = por %p238, %p239
      %p241 = scmp.ne.s32.totalorder %s229, %s230
      %p242 = scmp.eq.s32.totalorder %s31, 1
      %p243 = por %p241, %p242
      %p245 = scmp.ne.s32.totalorder %s230, %s244
      %p246 = scmp.eq.s32.totalorder %s31, 0
      %p247 = por %p245, %p246
      %s248 = ssub.s32 %s25, %s32
      %p249 = scmp.eq.s32.totalorder %s248, 0
      %s251 = sadd.s32 %s250, 1
      %s252 = scalar_select %p249, %s250, %s251
      %p255 = pneg %p249
      %p256 = scmp.eq.s32.totalorder %s25, 1
      %p257 = por %p255, %p256
      %p258 = scmp.ne.s32.totalorder %s250, %s253
      %p259 = scmp.eq.s32.totalorder %s25, 0
      %p260 = por %p258, %p259
      %p261 = scmp.ne.s32.totalorder %s250, %s253
      %p262 = scmp.eq.s32.totalorder %s30, 1
      %p263 = por %p261, %p262
      %p264 = scmp.ne.s32.totalorder %s253, %s254
      %p265 = scmp.eq.s32.totalorder %s30, 0
      %p266 = por %p264, %p265
      %p267 = scmp.ne.s32.totalorder %s253, %s254
      %p268 = scmp.eq.s32.totalorder %s31, 1
      %p269 = por %p267, %p268
      %p271 = scmp.ne.s32.totalorder %s254, %s270
      %p272 = scmp.eq.s32.totalorder %s31, 0
      %p273 = por %p271, %p272
      %p274 = scmp.le.s32.totalorder 1, %s25
      %p275 = scmp.lt.s32.totalorder %s25, 3
      %p276 = pnand %p274, %p275
      %p277 = pneg %p276
      // Predicated region
      $region9: #{tpu_custom_call.1} parent=5 // pred_check
        _
      $region10: #{tpu_custom_call.1} parent=5 // pred_check_branch
        %279 = sbr.rel (%p276) target = $region12
      $region11: #{tpu_custom_call.1} parent=5 // pred_region
        %s280 = ssub.s32 %s25, 1
        // Predicated region
        $region13: #{tpu_custom_call.1} parent=11 // pred_check
          %p281 = pneg %p72
        $region14: #{tpu_custom_call.1} parent=11 // pred_check_branch
          %283 = sbr.rel (%p281) target = $region16
        $region15: #{tpu_custom_call.1} parent=11 // pred_region
          %285 = vsyncadd [#allocation8], 0
          %s286 = sshll.u32 %s1, 4
          %s287 = int_to_ptr.hbm [resolvable:$true] %s286
          %s288 = sshll.u32 [#allocation7], 4
          %s289 = int_to_ptr.vmem [resolvable:$true] %s288
          %294 = dma.hbm_to_vmem [thread:$0]  %s287, 512, %s289, [#allocation8], 128, 128, 8
        $region16: #{tpu_custom_call.1} parent=11 // pred_fallthru
          _
        // Predicated region
        $region17: #{tpu_custom_call.1} parent=11 // pred_check
          %p295 = pneg %p93
        $region18: #{tpu_custom_call.1} parent=11 // pred_check_branch
          %297 = sbr.rel (%p295) target = $region20
        $region19: #{tpu_custom_call.1} parent=11 // pred_region
          %299 = vsyncadd [#allocation8], 0
          %s300 = sshll.u32 %s2, 4
          %s301 = int_to_ptr.hbm [resolvable:$true] %s300
          %s302 = sshll.u32 [#allocation9], 4
          %s303 = int_to_ptr.vmem [resolvable:$true] %s302
          %308 = dma.hbm_to_vmem [thread:$0]  %s301, 1024, %s303, [#allocation8], 128, 128, 8
        $region20: #{tpu_custom_call.1} parent=11 // pred_fallthru
          _
        // Predicated region
        $region21: #{tpu_custom_call.1} parent=11 // pred_check
          %p309 = pneg %p114
        $region22: #{tpu_custom_call.1} parent=11 // pred_check_branch
          %311 = sbr.rel (%p309) target = $region24
        $region23: #{tpu_custom_call.1} parent=11 // pred_region
          _
        $region24: #{tpu_custom_call.1} parent=11 // pred_fallthru
          _
        // Predicated region
        $region25: #{tpu_custom_call.1} parent=11 // pred_check
          %p312 = pneg %p135
        $region26: #{tpu_custom_call.1} parent=11 // pred_check_branch
          %314 = sbr.rel (%p312) target = $region28
        $region27: #{tpu_custom_call.1} parent=11 // pred_region
          %316 = vsyncadd [#allocation11], 0
          %s317 = sshll.u32 %s4, 4
          %s318 = int_to_ptr.hbm [resolvable:$true] %s317
          %s319 = sshll.u32 [#allocation10], 4
          %s320 = int_to_ptr.vmem [resolvable:$true] %s319
          %325 = dma.hbm_to_vmem [thread:$0]  %s318, 1024, %s320, [#allocation11], 128, 128, 8
        $region28: #{tpu_custom_call.1} parent=11 // pred_fallthru
          _
        // Predicated region
        $region29: #{tpu_custom_call.1} parent=11 // pred_check
          %p326 = pneg %p156
        $region30: #{tpu_custom_call.1} parent=11 // pred_check_branch
          %328 = sbr.rel (%p326) target = $region32
        $region31: #{tpu_custom_call.1} parent=11 // pred_region
          _
        $region32: #{tpu_custom_call.1} parent=11 // pred_fallthru
          _
        // Predicated region
        $region33: #{tpu_custom_call.1} parent=11 // pred_check
          %p329 = pneg %p177
        $region34: #{tpu_custom_call.1} parent=11 // pred_check_branch
          %331 = sbr.rel (%p329) target = $region36
        $region35: #{tpu_custom_call.1} parent=11 // pred_region
          %333 = vsyncadd [#allocation11], 0
          %s334 = sshll.u32 %s6, 4
          %s335 = int_to_ptr.hbm [resolvable:$true] %s334
          %s336 = sshll.u32 [#allocation12], 4
          %s337 = int_to_ptr.vmem [resolvable:$true] %s336
          %342 = dma.hbm_to_vmem [thread:$0]  %s335, 32, %s337, [#allocation11], 16, 16, 1
        $region36: #{tpu_custom_call.1} parent=11 // pred_fallthru
          _
        // Predicated region
        $region37: #{tpu_custom_call.1} parent=11 // pred_check
          %p343 = pneg %p198
        $region38: #{tpu_custom_call.1} parent=11 // pred_check_branch
          %345 = sbr.rel (%p343) target = $region40
        $region39: #{tpu_custom_call.1} parent=11 // pred_region
          _
        $region40: #{tpu_custom_call.1} parent=11 // pred_fallthru
          _
        // Predicated region
        $region41: #{tpu_custom_call.1} parent=11 // pred_check
          %p346 = pneg %p219
        $region42: #{tpu_custom_call.1} parent=11 // pred_check_branch
          %348 = sbr.rel (%p346) target = $region44
        $region43: #{tpu_custom_call.1} parent=11 // pred_region
          %350 = vsyncadd [#allocation14], 0
          %s351 = sshll.u32 %s8, 4
          %s352 = int_to_ptr.hbm [resolvable:$true] %s351
          %s353 = sshll.u32 [#allocation13], 4
          %s354 = int_to_ptr.vmem [resolvable:$true] %s353
          %359 = dma.hbm_to_vmem [thread:$0]  %s352, 1024, %s354, [#allocation14], 128, 128, 8
        $region44: #{tpu_custom_call.1} parent=11 // pred_fallthru
          _
        // Predicated region
        $region45: #{tpu_custom_call.1} parent=11 // pred_check
          %p360 = pneg %p240
        $region46: #{tpu_custom_call.1} parent=11 // pred_check_branch
          %362 = sbr.rel (%p360) target = $region48
        $region47: #{tpu_custom_call.1} parent=11 // pred_region
          _
        $region48: #{tpu_custom_call.1} parent=11 // pred_fallthru
          _
      $region12: #{tpu_custom_call.1} parent=5 // pred_fallthru
        _
      %p363 = scmp.lt.s32.totalorder %s25, 2
      // Predicated region
      $region49: #{tpu_custom_call.1} parent=5 // pred_check
        %p364 = pneg %p363
      $region50: #{tpu_custom_call.1} parent=5 // pred_check_branch
        %366 = sbr.rel (%p364) target = $region52
      $region51: #{tpu_custom_call.1} parent=5 // pred_region
        // Predicated region
        $region53: #{tpu_custom_call.1} parent=51 // pred_check
          %p367 = pneg %p45
        $region54: #{tpu_custom_call.1} parent=51 // pred_check_branch
          %369 = sbr.rel (%p367) target = $region56
        $region55: #{tpu_custom_call.1} parent=51 // pred_region
          %s370 = sand.u32 %s35, 1
          %s371 = scalar_lea.sflag [#allocation5], %s370
          %s372 = sand.u32 %s35, 1
          %s373 = smul.addr %s372, 8
          %s374 = scalar_lea.vmem [#allocation4], %s373
          %376 = vsyncadd %s371, 0
          %s377 = smul.addr %s25, 8
          %s378 = scalar_lea.hbm %s0, %s377
          %s380 = sshll.u32 %s378, 4
          %s381 = int_to_ptr.hbm [resolvable:$true] %s380
          %s382 = sshll.u32 %s374, 4
          %s383 = int_to_ptr.vmem [resolvable:$true] %s382
          %385 = dma.hbm_to_vmem [thread:$0]  %s381, 128, %s383, %s371
        $region56: #{tpu_custom_call.1} parent=51 // pred_fallthru
          _
      $region52: #{tpu_custom_call.1} parent=5 // pred_fallthru
        _
      %p386 = scmp.le.s32.totalorder 1, %s25
      %p387 = scmp.lt.s32.totalorder %s25, 3
      %p388 = pnand %p386, %p387
      %p389 = pneg %p388
      // Predicated region
      $region57: #{tpu_custom_call.1} parent=5 // pred_check
        _
      $region58: #{tpu_custom_call.1} parent=5 // pred_check_branch
        %391 = sbr.rel (%p388) target = $region60
      $region59: #{tpu_custom_call.1} parent=5 // pred_region
        %s392 = ssub.s32 %s25, 1
        %s393 = sand.u32 %s38, 1
        %s394 = scalar_lea.sflag [#allocation5], %s393
        %s395 = sand.u32 %s38, 1
        %s396 = smul.addr %s395, 8
        %s397 = scalar_lea.vmem [#allocation4], %s396
        // Predicated region
        $region61: #{tpu_custom_call.1} parent=59 // pred_check
          %p398 = pneg %p51
        $region62: #{tpu_custom_call.1} parent=59 // pred_check_branch
          %400 = sbr.rel (%p398) target = $region64
        $region63: #{tpu_custom_call.1} parent=59 // pred_region
          %402 = dma.done %s394, 128
        $region64: #{tpu_custom_call.1} parent=59 // pred_fallthru
          _
        // Predicated region
        $region65: #{tpu_custom_call.1} parent=59 // pred_check
          %p403 = pneg %p72
        $region66: #{tpu_custom_call.1} parent=59 // pred_check_branch
          %405 = sbr.rel (%p403) target = $region68
        $region67: #{tpu_custom_call.1} parent=59 // pred_region
          %407 = dma.done [#allocation8], 512
        $region68: #{tpu_custom_call.1} parent=59 // pred_fallthru
          _
        // Predicated region
        $region69: #{tpu_custom_call.1} parent=59 // pred_check
          %p408 = pneg %p93
        $region70: #{tpu_custom_call.1} parent=59 // pred_check_branch
          %410 = sbr.rel (%p408) target = $region72
        $region71: #{tpu_custom_call.1} parent=59 // pred_region
          %412 = dma.done [#allocation8], 1024
        $region72: #{tpu_custom_call.1} parent=59 // pred_fallthru
          _
        // Predicated region
        $region73: #{tpu_custom_call.1} parent=59 // pred_check
          %p413 = pneg %p135
        $region74: #{tpu_custom_call.1} parent=59 // pred_check_branch
          %415 = sbr.rel (%p413) target = $region76
        $region75: #{tpu_custom_call.1} parent=59 // pred_region
          %417 = dma.done [#allocation11], 1024
        $region76: #{tpu_custom_call.1} parent=59 // pred_fallthru
          _
        // Predicated region
        $region77: #{tpu_custom_call.1} parent=59 // pred_check
          %p418 = pneg %p177
        $region78: #{tpu_custom_call.1} parent=59 // pred_check_branch
          %420 = sbr.rel (%p418) target = $region80
        $region79: #{tpu_custom_call.1} parent=59 // pred_region
          %422 = dma.done [#allocation11], 32
        $region80: #{tpu_custom_call.1} parent=59 // pred_fallthru
          _
        // Predicated region
        $region81: #{tpu_custom_call.1} parent=59 // pred_check
          %p423 = pneg %p219
        $region82: #{tpu_custom_call.1} parent=59 // pred_check_branch
          %425 = sbr.rel (%p423) target = $region84
        $region83: #{tpu_custom_call.1} parent=59 // pred_region
          %427 = dma.done [#allocation14], 1024
        $region84: #{tpu_custom_call.1} parent=59 // pred_fallthru
          _
        %s428 = sand.u32 %s38, 1
        %s429 = scalar_lea.sflag [#allocation5], %s428
        %s430 = sand.u32 %s38, 1
        %s431 = smul.addr %s430, 8
        %s432 = scalar_lea.vmem [#allocation4], %s431
        %p433 = pneg %p51
        %p434 = pneg %p48
        %p435 = pneg %p72
        %p436 = pneg %p69
        %p437 = pneg %p93
        %p438 = pneg %p90
        %p439 = pneg %p114
        %p440 = pneg %p111
        %p441 = pneg %p135
        %p442 = pneg %p132
        %p443 = pneg %p156
        %p444 = pneg %p153
        %p445 = pneg %p177
        %p446 = pneg %p174
        %p447 = pneg %p198
        %p448 = pneg %p195
        %p449 = pneg %p219
        %p450 = pneg %p216
        %p451 = pneg %p240
        %p452 = pneg %p237
        %p453 = pneg %p266
        %p454 = pneg %p263
        %s455 = sand.u32 %s253, 1
        %s456 = scalar_lea.sflag [#allocation6], %s455
        %s457 = sand.u32 %s253, 1
        %s458 = smul.addr %s457, 8
        %s459 = scalar_lea.vmem [#allocation15], %s458
        %v460 = vld [vmem:[%s397] sm:$0xff]
        %v461 = vld [vmem:[#allocation7] sm:$0xff]
        %v462 = vld [vmem:[#allocation7 + $0x8] sm:$0xff]
        %v463 = vld [vmem:[#allocation7 + $0x10] sm:$0xff]
        %v464 = vld [vmem:[#allocation7 + $0x18] sm:$0xff]
        %v465 = vlaneseq
        %v466 = vand.u32 %v465, 127
        %v467 = vld [vmem:[#allocation9] sm:$0xff]
        %v468 = vld [vmem:[#allocation9 + $0x8] sm:$0xff]
        %v469 = vld [vmem:[#allocation9 + $0x10] sm:$0xff]
        %v470 = vld [vmem:[#allocation9 + $0x18] sm:$0xff]
        %v471 = vld [vmem:[%s3] sm:$0x1]
        %v473 = vperm.slane %v471, 0
        %vm475 = vcmask 261120
        %v477 = vsel %vm475, %v460, 0
        %479 = vmatpush.msra.mxu0 0.0
        %480 = vmatpush.msra.mxu0 0.0
        %481 = vmatpush.msra.mxu0 0.0
        %482 = vmatpush.msra.mxu0 0.0
        %483 = vmatpush.msra.mxu0 0.0
        %484 = vmatpush.msra.mxu0 0.0
        %485 = vmatpush.msra.mxu0 0.0
        %486 = vmatpush.msra.mxu0 0.0
        %487 = vmatpush.msra.mxu0 0.0
        %488 = vmatpush.msra.mxu0 0.0
        %489 = vmatpush.msra.mxu0 0.0
        %490 = vmatpush.msra.mxu0 0.0
        %491 = vmatpush.msra.mxu0 %v470
        %492 = vmatpush.msra.mxu0 %v469
        %493 = vmatpush.msra.mxu0 %v468
        %494 = vmatpush.msra.mxu0 %v467
        %495 = vmatmul.f32.gmra.mxu0 %v477
        %v496 = vpop.f32.mrf.mxu0
        %v497 = vadd.f32 %v473, %v496
        %498 = vdwg.mxu0
        %vm499 = vcmask 64512
        %500 = vst.msk [vmem:[#allocation2] sm:$0xff] %vm499, %v497
        %502 = vrot.lane.b32.xlu0 %v497, 96
        %v503 = vpop.permute.xlu0 %502
        %505 = vst.msk [vmem:[#allocation3] sm:$0xff] %vm499, %v503
        %506 = vrot.lane.b32.xlu0 %v497, 120
        %v507 = vpop.permute.xlu0 %506
        %509 = vst.msk [vmem:[#allocation2 + $0x8] sm:$0xff] %vm499, %v507
        %510 = vrot.lane.b32.xlu0 %v497, 88
        %v511 = vpop.permute.xlu0 %510
        %513 = vst.msk [vmem:[#allocation3 + $0x8] sm:$0xff] %vm499, %v511
        %514 = vrot.lane.b32.xlu0 %v497, 112
        %v515 = vpop.permute.xlu0 %514
        %517 = vst.msk [vmem:[#allocation2 + $0x10] sm:$0xff] %vm499, %v515
        %518 = vrot.lane.b32.xlu0 %v497, 80
        %v519 = vpop.permute.xlu0 %518
        %521 = vst.msk [vmem:[#allocation3 + $0x10] sm:$0xff] %vm499, %v519
        %522 = vrot.lane.b32.xlu0 %v497, 104
        %v523 = vpop.permute.xlu0 %522
        %525 = vst.msk [vmem:[#allocation2 + $0x18] sm:$0xff] %vm499, %v523
        %526 = vrot.lane.b32.xlu0 %v497, 72
        %v527 = vpop.permute.xlu0 %526
        %529 = vst.msk [vmem:[#allocation3 + $0x18] sm:$0xff] %vm499, %v527
        %v530 = vld [vmem:[#allocation2] sm:$0xff]
        %v531 = vld [vmem:[#allocation2 + $0x8] sm:$0xff]
        %v532 = vld [vmem:[#allocation2 + $0x10] sm:$0xff]
        %v533 = vld [vmem:[#allocation2 + $0x18] sm:$0xff]
        %v534 = vld [vmem:[#allocation3] sm:$0xff]
        %v535 = vld [vmem:[#allocation3 + $0x8] sm:$0xff]
        %v536 = vld [vmem:[#allocation3 + $0x10] sm:$0xff]
        %v537 = vld [vmem:[#allocation3 + $0x18] sm:$0xff]
        %v539 = vsel %vm499, %v530, 0
        %v542 = vsel %vm499, %v531, 0
        %v545 = vsel %vm499, %v532, 0
        %v548 = vsel %vm499, %v533, 0
        %v551 = vsel %vm499, %v534, 0
        %v554 = vsel %vm499, %v535, 0
        %v557 = vsel %vm499, %v536, 0
        %v560 = vsel %vm499, %v537, 0
        %562 = vmatpush.xpose.msra.mxu0 0.0
        %563 = vmatpush.xpose.msra.mxu0 0.0
        %564 = vmatpush.xpose.msra.mxu0 0.0
        %565 = vmatpush.xpose.msra.mxu0 0.0
        %566 = vmatpush.xpose.msra.mxu0 0.0
        %567 = vmatpush.xpose.msra.mxu0 0.0
        %568 = vmatpush.xpose.msra.mxu0 0.0
        %569 = vmatpush.xpose.msra.mxu0 0.0
        %570 = vmatpush.xpose.msra.mxu0 0.0
        %571 = vmatpush.xpose.msra.mxu0 0.0
        %572 = vmatpush.xpose.msra.mxu0 0.0
        %573 = vmatpush.xpose.msra.mxu0 0.0
        %574 = vmatpush.xpose.msra.mxu0 %v560
        %575 = vmatpush.xpose.msra.mxu0 %v557
        %576 = vmatpush.xpose.msra.mxu0 %v554
        %577 = vmatpush.xpose.msra.mxu0 %v551
        %578 = vmatmul.f32.gmra.mxu0 %v539
        %v579 = vpop.f32.mrf.mxu0
        %v580 = vadd.f32 0.0, %v579
        %581 = vmatmul.f32.gmra.mxu0 %v542
        %v582 = vpop.f32.mrf.mxu0
        %v583 = vadd.f32 0.0, %v582
        %584 = vmatmul.f32.gmra.mxu0 %v545
        %v585 = vpop.f32.mrf.mxu0
        %v586 = vadd.f32 0.0, %v585
        %587 = vmatmul.f32.gmra.mxu0 %v548
        %v588 = vpop.f32.mrf.mxu0
        %v589 = vadd.f32 0.0, %v588
        %590 = vdwg.mxu0
        %v591 = vmul.f32 %v580, 0.03125
        %v592 = vmul.f32 %v583, 0.03125
        %v593 = vmul.f32 %v586, 0.03125
        %v594 = vmul.f32 %v589, 0.03125
        %v595 = vadd.f32 %v591, %v461
        %v596 = vadd.f32 %v592, %v462
        %v597 = vadd.f32 %v593, %v463
        %v598 = vadd.f32 %v594, %v464
        %v599 = vsel %vm475, %v595, -inf
        %v600 = vsel %vm475, %v596, -inf
        %v601 = vsel %vm475, %v597, -inf
        %v602 = vsel %vm475, %v598, -inf
        %v603 = vmax.f32 %v599, %v600
        %v604 = vmax.f32 %v601, %v602
        %v605 = vmax.f32 %v603, %v604
        %v606 = vrot.slane %v605, 4
        %v607 = vmax.f32 %v605, %v606
        %v608 = vrot.slane %v607, 2
        %v609 = vmax.f32 %v607, %v608
        %v610 = vrot.slane %v609, 1
        %v611 = vmax.f32 %v609, %v610
        %v612 = vsub.f32 %v595, %v611
        %v613 = vsub.f32 %v596, %v611
        %v614 = vsub.f32 %v597, %v611
        %v615 = vsub.f32 %v598, %v611
        %v616 = vmul.f32 %v612, 1.442695
        %v617 = vpow.pop %v616
        %v618 = vmul.f32 %v613, 1.442695
        %v619 = vpow.pop %v618
        %v620 = vmul.f32 %v614, 1.442695
        %v621 = vpow.pop %v620
        %v622 = vmul.f32 %v615, 1.442695
        %v623 = vpow.pop %v622
        %v624 = vsel %vm475, %v617, 0.0
        %v625 = vsel %vm475, %v619, 0.0
        %v626 = vadd.f32 %v624, %v625
        %v627 = vsel %vm475, %v621, 0.0
        %v628 = vadd.f32 %v626, %v627
        %v629 = vsel %vm475, %v623, 0.0
        %v630 = vadd.f32 %v628, %v629
        %v631 = vrot.slane %v630, 4
        %v632 = vadd.f32 %v630, %v631
        %v633 = vrot.slane %v632, 2
        %v634 = vadd.f32 %v632, %v633
        %v635 = vrot.slane %v634, 1
        %v636 = vadd.f32 %v634, %v635
        %v637 = vrcp.pop %v636
        %v638 = vmul.f32 %v617, %v637
        %v639 = vmul.f32 %v619, %v637
        %v640 = vmul.f32 %v621, %v637
        %v641 = vmul.f32 %v623, %v637
        %v642 = vsel %vm475, %v638, 0.0
        %643 = vadd.xlane.f32.xlu0 %v642
        %v644 = vpop.xlane.xlu0 %643
        %v645 = vsel %vm475, %v639, 0.0
        %646 = vadd.xlane.f32.xlu0 %v645
        %v647 = vpop.xlane.xlu0 %646
        %v648 = vsel %vm475, %v640, 0.0
        %649 = vadd.xlane.f32.xlu0 %v648
        %v650 = vpop.xlane.xlu0 %649
        %v651 = vsel %vm475, %v641, 0.0
        %652 = vadd.xlane.f32.xlu0 %v651
        %v653 = vpop.xlane.xlu0 %652
        %vm654 = vcmp.ge.s32.totalorder %v466, 0
        %vm655 = vcmp.lt.s32.totalorder %v466, 8
        %vm656 = vmand %vm654, %vm655
        %v657 = vsel %vm656, %v644, 0.0
        %vm658 = vcmp.ge.s32.totalorder %v466, 8
        %vm659 = vcmp.lt.s32.totalorder %v466, 16
        %vm660 = vmand %vm658, %vm659
        %v661 = vsel %vm660, %v647, %v657
        %vm662 = vcmp.ge.s32.totalorder %v466, 16
        %vm663 = vcmp.lt.s32.totalorder %v466, 24
        %vm664 = vmand %vm662, %vm663
        %v665 = vsel %vm664, %v650, %v661
        %vm666 = vcmp.ge.s32.totalorder %v466, 24
        %vm667 = vcmp.lt.s32.totalorder %v466, 32
        %vm668 = vmand %vm666, %vm667
        %v669 = vsel %vm668, %v653, %v665
        %671 = vrot.lane.b32.xlu0 %v669, 64
        %v672 = vpop.permute.xlu0 %671
        %v674 = vmul.f32 %v497, %v672
        %v675 = vld [vmem:[#allocation10] sm:$0xff]
        %v676 = vld [vmem:[#allocation10 + $0x8] sm:$0xff]
        %v677 = vld [vmem:[#allocation10 + $0x10] sm:$0xff]
        %v678 = vld [vmem:[#allocation10 + $0x18] sm:$0xff]
        %v679 = vld [vmem:[%s5] sm:$0x1]
        %v681 = vperm.slane %v679, 0
        %684 = vrot.lane.b32.xlu0 %v674, 64
        %v685 = vpop.permute.xlu0 %684
        %v686 = vsel %vm475, %v685, 0
        %688 = vmatpush.msra.mxu0 0.0
        %689 = vmatpush.msra.mxu0 0.0
        %690 = vmatpush.msra.mxu0 0.0
        %691 = vmatpush.msra.mxu0 0.0
        %692 = vmatpush.msra.mxu0 0.0
        %693 = vmatpush.msra.mxu0 0.0
        %694 = vmatpush.msra.mxu0 0.0
        %695 = vmatpush.msra.mxu0 0.0
        %696 = vmatpush.msra.mxu0 0.0
        %697 = vmatpush.msra.mxu0 0.0
        %698 = vmatpush.msra.mxu0 0.0
        %699 = vmatpush.msra.mxu0 0.0
        %700 = vmatpush.msra.mxu0 %v678
        %701 = vmatpush.msra.mxu0 %v677
        %702 = vmatpush.msra.mxu0 %v676
        %703 = vmatpush.msra.mxu0 %v675
        %704 = vmatmul.f32.gmra.mxu0 %v686
        %v705 = vpop.f32.mrf.mxu0
        %v706 = vadd.f32 %v681, %v705
        %707 = vdwg.mxu0
        %v708 = vadd.f32 %v706, %v460
        %v709 = vsel %vm475, %v708, 0.0
        %710 = vadd.xlane.f32.xlu0 %v709
        %v711 = vpop.xlane.xlu0 %710
        %v712 = vrcp.pop 32.0
        %v713 = vmul.f32 32.0, %v712
        %v714 = vsub.f32 1.0, %v713
        %v715 = vmul.f32 %v712, %v714
        %v716 = vadd.f32 %v712, %v715
        %vm717 = vweird.f32 %v712
        %v718 = vsel %vm717, %v712, %v716
        %v719 = vmul.f32 %v711, %v718
        %v720 = vsub.f32 %v708, %v719
        %v721 = vmul.f32 %v720, %v720
        %v722 = vsel %vm475, %v721, 0.0
        %723 = vadd.xlane.f32.xlu0 %v722
        %v724 = vpop.xlane.xlu0 %723
        %v725 = vmul.f32 %v724, %v718
        %v726 = vadd.f32 %v725, 1e-05
        %v727 = vrsqrt.pop %v726
        %v728 = vmul.f32 %v727, %v726
        %v729 = vmul.f32 %v728, %v727
        %v730 = vmul.f32 0.5, %v729
        %v731 = vsub.f32 1.5, %v730
        %v732 = vmul.f32 %v727, %v731
        %vm733 = vweird.f32 %v726
        %vm734 = vweird.f32 %v727
        %vm735 = vmor %vm733, %vm734
        %v736 = vsel %vm735, %v727, %v732
        %v737 = vmul.f32 %v720, %v736
        %v738 = vld [vmem:[#allocation12] sm:$0x1]
        %v740 = vperm.slane %v738, 0
        %v742 = vmul.f32 %v737, %v740
        %v743 = vld [vmem:[%s7] sm:$0x1]
        %v745 = vperm.slane %v743, 0
        %v747 = vadd.f32 %v742, %v745
        %v748 = vld [vmem:[#allocation13] sm:$0xff]
        %v749 = vld [vmem:[#allocation13 + $0x8] sm:$0xff]
        %v750 = vld [vmem:[#allocation13 + $0x10] sm:$0xff]
        %v751 = vld [vmem:[#allocation13 + $0x18] sm:$0xff]
        %v752 = vld [vmem:[%s9] sm:$0x1]
        %v754 = vperm.slane %v752, 0
        %v757 = vsel %vm475, %v747, 0
        %759 = vmatpush.msra.mxu0 0.0
        %760 = vmatpush.msra.mxu0 0.0
        %761 = vmatpush.msra.mxu0 0.0
        %762 = vmatpush.msra.mxu0 0.0
        %763 = vmatpush.msra.mxu0 0.0
        %764 = vmatpush.msra.mxu0 0.0
        %765 = vmatpush.msra.mxu0 0.0
        %766 = vmatpush.msra.mxu0 0.0
        %767 = vmatpush.msra.mxu0 0.0
        %768 = vmatpush.msra.mxu0 0.0
        %769 = vmatpush.msra.mxu0 0.0
        %770 = vmatpush.msra.mxu0 0.0
        %771 = vmatpush.msra.mxu0 %v751
        %772 = vmatpush.msra.mxu0 %v750
        %773 = vmatpush.msra.mxu0 %v749
        %774 = vmatpush.msra.mxu0 %v748
        %775 = vmatmul.f32.gmra.mxu0 %v757
        %v776 = vpop.f32.mrf.mxu0
        %v777 = vadd.f32 %v754, %v776
        %778 = vdwg.mxu0
        %v779 = vadd.f32 %v777, %v747
        %s780 = scalar_lea.vmem [#allocation9], 32
        %v781 = vld [vmem:[%s780] sm:$0xff]
        %v782 = vld [vmem:[%s780 + $0x8] sm:$0xff]
        %v783 = vld [vmem:[%s780 + $0x10] sm:$0xff]
        %v784 = vld [vmem:[%s780 + $0x18] sm:$0xff]
        %s785 = scalar_lea.vmem %s3, 1
        %v786 = vld [vmem:[%s785] sm:$0x1]
        %v788 = vperm.slane %v786, 0
        %v791 = vsel %vm475, %v779, 0
        %793 = vmatpush.msra.mxu0 0.0
        %794 = vmatpush.msra.mxu0 0.0
        %795 = vmatpush.msra.mxu0 0.0
        %796 = vmatpush.msra.mxu0 0.0
        %797 = vmatpush.msra.mxu0 0.0
        %798 = vmatpush.msra.mxu0 0.0
        %799 = vmatpush.msra.mxu0 0.0
        %800 = vmatpush.msra.mxu0 0.0
        %801 = vmatpush.msra.mxu0 0.0
        %802 = vmatpush.msra.mxu0 0.0
        %803 = vmatpush.msra.mxu0 0.0
        %804 = vmatpush.msra.mxu0 0.0
        %805 = vmatpush.msra.mxu0 %v784
        %806 = vmatpush.msra.mxu0 %v783
        %807 = vmatpush.msra.mxu0 %v782
        %808 = vmatpush.msra.mxu0 %v781
        %809 = vmatmul.f32.gmra.mxu0 %v791
        %v810 = vpop.f32.mrf.mxu0
        %v811 = vadd.f32 %v788, %v810
        %812 = vdwg.mxu0
        %813 = vst.msk [vmem:[#allocation2] sm:$0xff] %vm499, %v811
        %815 = vrot.lane.b32.xlu0 %v811, 96
        %v816 = vpop.permute.xlu0 %815
        %818 = vst.msk [vmem:[#allocation3] sm:$0xff] %vm499, %v816
        %819 = vrot.lane.b32.xlu0 %v811, 120
        %v820 = vpop.permute.xlu0 %819
        %822 = vst.msk [vmem:[#allocation2 + $0x8] sm:$0xff] %vm499, %v820
        %823 = vrot.lane.b32.xlu0 %v811, 88
        %v824 = vpop.permute.xlu0 %823
        %826 = vst.msk [vmem:[#allocation3 + $0x8] sm:$0xff] %vm499, %v824
        %827 = vrot.lane.b32.xlu0 %v811, 112
        %v828 = vpop.permute.xlu0 %827
        %830 = vst.msk [vmem:[#allocation2 + $0x10] sm:$0xff] %vm499, %v828
        %831 = vrot.lane.b32.xlu0 %v811, 80
        %v832 = vpop.permute.xlu0 %831
        %834 = vst.msk [vmem:[#allocation3 + $0x10] sm:$0xff] %vm499, %v832
        %835 = vrot.lane.b32.xlu0 %v811, 104
        %v836 = vpop.permute.xlu0 %835
        %838 = vst.msk [vmem:[#allocation2 + $0x18] sm:$0xff] %vm499, %v836
        %839 = vrot.lane.b32.xlu0 %v811, 72
        %v840 = vpop.permute.xlu0 %839
        %842 = vst.msk [vmem:[#allocation3 + $0x18] sm:$0xff] %vm499, %v840
        %v843 = vld [vmem:[#allocation2] sm:$0xff]
        %v844 = vld [vmem:[#allocation2 + $0x8] sm:$0xff]
        %v845 = vld [vmem:[#allocation2 + $0x10] sm:$0xff]
        %v846 = vld [vmem:[#allocation2 + $0x18] sm:$0xff]
        %v847 = vld [vmem:[#allocation3] sm:$0xff]
        %v848 = vld [vmem:[#allocation3 + $0x8] sm:$0xff]
        %v849 = vld [vmem:[#allocation3 + $0x10] sm:$0xff]
        %v850 = vld [vmem:[#allocation3 + $0x18] sm:$0xff]
        %v852 = vsel %vm499, %v843, 0
        %v855 = vsel %vm499, %v844, 0
        %v858 = vsel %vm499, %v845, 0
        %v861 = vsel %vm499, %v846, 0
        %v864 = vsel %vm499, %v847, 0
        %v867 = vsel %vm499, %v848, 0
        %v870 = vsel %vm499, %v849, 0
        %v873 = vsel %vm499, %v850, 0
        %875 = vmatpush.xpose.msra.mxu0 0.0
        %876 = vmatpush.xpose.msra.mxu0 0.0
        %877 = vmatpush.xpose.msra.mxu0 0.0
        %878 = vmatpush.xpose.msra.mxu0 0.0
        %879 = vmatpush.xpose.msra.mxu0 0.0
        %880 = vmatpush.xpose.msra.mxu0 0.0
        %881 = vmatpush.xpose.msra.mxu0 0.0
        %882 = vmatpush.xpose.msra.mxu0 0.0
        %883 = vmatpush.xpose.msra.mxu0 0.0
        %884 = vmatpush.xpose.msra.mxu0 0.0
        %885 = vmatpush.xpose.msra.mxu0 0.0
        %886 = vmatpush.xpose.msra.mxu0 0.0
        %887 = vmatpush.xpose.msra.mxu0 %v873
        %888 = vmatpush.xpose.msra.mxu0 %v870
        %889 = vmatpush.xpose.msra.mxu0 %v867
        %890 = vmatpush.xpose.msra.mxu0 %v864
        %891 = vmatmul.f32.gmra.mxu0 %v852
        %v892 = vpop.f32.mrf.mxu0
        %v893 = vadd.f32 0.0, %v892
        %894 = vmatmul.f32.gmra.mxu0 %v855
        %v895 = vpop.f32.mrf.mxu0
        %v896 = vadd.f32 0.0, %v895
        %897 = vmatmul.f32.gmra.mxu0 %v858
        %v898 = vpop.f32.mrf.mxu0
        %v899 = vadd.f32 0.0, %v898
        %900 = vmatmul.f32.gmra.mxu0 %v861
        %v901 = vpop.f32.mrf.mxu0
        %v902 = vadd.f32 0.0, %v901
        %903 = vdwg.mxu0
        %v904 = vmul.f32 %v893, 0.03125
        %v905 = vmul.f32 %v896, 0.03125
        %v906 = vmul.f32 %v899, 0.03125
        %v907 = vmul.f32 %v902, 0.03125
        %v908 = vadd.f32 %v904, %v461
        %v909 = vadd.f32 %v905, %v462
        %v910 = vadd.f32 %v906, %v463
        %v911 = vadd.f32 %v907, %v464
        %v912 = vsel %vm475, %v908, -inf
        %v913 = vsel %vm475, %v909, -inf
        %v914 = vsel %vm475, %v910, -inf
        %v915 = vsel %vm475, %v911, -inf
        %v916 = vmax.f32 %v912, %v913
        %v917 = vmax.f32 %v914, %v915
        %v918 = vmax.f32 %v916, %v917
        %v919 = vrot.slane %v918, 4
        %v920 = vmax.f32 %v918, %v919
        %v921 = vrot.slane %v920, 2
        %v922 = vmax.f32 %v920, %v921
        %v923 = vrot.slane %v922, 1
        %v924 = vmax.f32 %v922, %v923
        %v925 = vsub.f32 %v908, %v924
        %v926 = vsub.f32 %v909, %v924
        %v927 = vsub.f32 %v910, %v924
        %v928 = vsub.f32 %v911, %v924
        %v929 = vmul.f32 %v925, 1.442695
        %v930 = vpow.pop %v929
        %v931 = vmul.f32 %v926, 1.442695
        %v932 = vpow.pop %v931
        %v933 = vmul.f32 %v927, 1.442695
        %v934 = vpow.pop %v933
        %v935 = vmul.f32 %v928, 1.442695
        %v936 = vpow.pop %v935
        %v937 = vsel %vm475, %v930, 0.0
        %v938 = vsel %vm475, %v932, 0.0
        %v939 = vadd.f32 %v937, %v938
        %v940 = vsel %vm475, %v934, 0.0
        %v941 = vadd.f32 %v939, %v940
        %v942 = vsel %vm475, %v936, 0.0
        %v943 = vadd.f32 %v941, %v942
        %v944 = vrot.slane %v943, 4
        %v945 = vadd.f32 %v943, %v944
        %v946 = vrot.slane %v945, 2
        %v947 = vadd.f32 %v945, %v946
        %v948 = vrot.slane %v947, 1
        %v949 = vadd.f32 %v947, %v948
        %v950 = vrcp.pop %v949
        %v951 = vmul.f32 %v930, %v950
        %v952 = vmul.f32 %v932, %v950
        %v953 = vmul.f32 %v934, %v950
        %v954 = vmul.f32 %v936, %v950
        %v955 = vsel %vm475, %v951, 0.0
        %956 = vadd.xlane.f32.xlu0 %v955
        %v957 = vpop.xlane.xlu0 %956
        %v958 = vsel %vm475, %v952, 0.0
        %959 = vadd.xlane.f32.xlu0 %v958
        %v960 = vpop.xlane.xlu0 %959
        %v961 = vsel %vm475, %v953, 0.0
        %962 = vadd.xlane.f32.xlu0 %v961
        %v963 = vpop.xlane.xlu0 %962
        %v964 = vsel %vm475, %v954, 0.0
        %965 = vadd.xlane.f32.xlu0 %v964
        %v966 = vpop.xlane.xlu0 %965
        %v967 = vsel %vm656, %v957, 0.0
        %v968 = vsel %vm660, %v960, %v967
        %v969 = vsel %vm664, %v963, %v968
        %v970 = vsel %vm668, %v966, %v969
        %972 = vrot.lane.b32.xlu0 %v970, 64
        %v973 = vpop.permute.xlu0 %972
        %v975 = vmul.f32 %v811, %v973
        %s976 = scalar_lea.vmem [#allocation10], 32
        %v977 = vld [vmem:[%s976] sm:$0xff]
        %v978 = vld [vmem:[%s976 + $0x8] sm:$0xff]
        %v979 = vld [vmem:[%s976 + $0x10] sm:$0xff]
        %v980 = vld [vmem:[%s976 + $0x18] sm:$0xff]
        %s981 = scalar_lea.vmem %s5, 1
        %v982 = vld [vmem:[%s981] sm:$0x1]
        %v984 = vperm.slane %v982, 0
        %987 = vrot.lane.b32.xlu0 %v975, 64
        %v988 = vpop.permute.xlu0 %987
        %v989 = vsel %vm475, %v988, 0
        %991 = vmatpush.msra.mxu0 0.0
        %992 = vmatpush.msra.mxu0 0.0
        %993 = vmatpush.msra.mxu0 0.0
        %994 = vmatpush.msra.mxu0 0.0
        %995 = vmatpush.msra.mxu0 0.0
        %996 = vmatpush.msra.mxu0 0.0
        %997 = vmatpush.msra.mxu0 0.0
        %998 = vmatpush.msra.mxu0 0.0
        %999 = vmatpush.msra.mxu0 0.0
        %1000 = vmatpush.msra.mxu0 0.0
        %1001 = vmatpush.msra.mxu0 0.0
        %1002 = vmatpush.msra.mxu0 0.0
        %1003 = vmatpush.msra.mxu0 %v980
        %1004 = vmatpush.msra.mxu0 %v979
        %1005 = vmatpush.msra.mxu0 %v978
        %1006 = vmatpush.msra.mxu0 %v977
        %1007 = vmatmul.f32.gmra.mxu0 %v989
        %v1008 = vpop.f32.mrf.mxu0
        %v1009 = vadd.f32 %v984, %v1008
        %1010 = vdwg.mxu0
        %v1011 = vadd.f32 %v1009, %v779
        %v1012 = vsel %vm475, %v1011, 0.0
        %1013 = vadd.xlane.f32.xlu0 %v1012
        %v1014 = vpop.xlane.xlu0 %1013
        %v1015 = vmul.f32 %v1014, %v718
        %v1016 = vsub.f32 %v1011, %v1015
        %v1017 = vmul.f32 %v1016, %v1016
        %v1018 = vsel %vm475, %v1017, 0.0
        %1019 = vadd.xlane.f32.xlu0 %v1018
        %v1020 = vpop.xlane.xlu0 %1019
        %v1021 = vmul.f32 %v1020, %v718
        %v1022 = vadd.f32 %v1021, 1e-05
        %v1023 = vrsqrt.pop %v1022
        %v1024 = vmul.f32 %v1023, %v1022
        %v1025 = vmul.f32 %v1024, %v1023
        %v1026 = vmul.f32 0.5, %v1025
        %v1027 = vsub.f32 1.5, %v1026
        %v1028 = vmul.f32 %v1023, %v1027
        %vm1029 = vweird.f32 %v1022
        %vm1030 = vweird.f32 %v1023
        %vm1031 = vmor %vm1029, %vm1030
        %v1032 = vsel %vm1031, %v1023, %v1028
        %v1033 = vmul.f32 %v1016, %v1032
        %s1034 = scalar_lea.vmem [#allocation12], 1
        %v1035 = vld [vmem:[%s1034] sm:$0x1]
        %v1037 = vperm.slane %v1035, 0
        %v1039 = vmul.f32 %v1033, %v1037
        %s1040 = scalar_lea.vmem %s7, 1
        %v1041 = vld [vmem:[%s1040] sm:$0x1]
        %v1043 = vperm.slane %v1041, 0
        %v1045 = vadd.f32 %v1039, %v1043
        %s1046 = scalar_lea.vmem [#allocation13], 32
        %v1047 = vld [vmem:[%s1046] sm:$0xff]
        %v1048 = vld [vmem:[%s1046 + $0x8] sm:$0xff]
        %v1049 = vld [vmem:[%s1046 + $0x10] sm:$0xff]
        %v1050 = vld [vmem:[%s1046 + $0x18] sm:$0xff]
        %s1051 = scalar_lea.vmem %s9, 1
        %v1052 = vld [vmem:[%s1051] sm:$0x1]
        %v1054 = vperm.slane %v1052, 0
        %v1057 = vsel %vm475, %v1045, 0
        %1059 = vmatpush.msra.mxu0 0.0
        %1060 = vmatpush.msra.mxu0 0.0
        %1061 = vmatpush.msra.mxu0 0.0
        %1062 = vmatpush.msra.mxu0 0.0
        %1063 = vmatpush.msra.mxu0 0.0
        %1064 = vmatpush.msra.mxu0 0.0
        %1065 = vmatpush.msra.mxu0 0.0
        %1066 = vmatpush.msra.mxu0 0.0
        %1067 = vmatpush.msra.mxu0 0.0
        %1068 = vmatpush.msra.mxu0 0.0
        %1069 = vmatpush.msra.mxu0 0.0
        %1070 = vmatpush.msra.mxu0 0.0
        %1071 = vmatpush.msra.mxu0 %v1050
        %1072 = vmatpush.msra.mxu0 %v1049
        %1073 = vmatpush.msra.mxu0 %v1048
        %1074 = vmatpush.msra.mxu0 %v1047
        %1075 = vmatmul.f32.gmra.mxu0 %v1057
        %v1076 = vpop.f32.mrf.mxu0
        %v1077 = vadd.f32 %v1054, %v1076
        %1078 = vdwg.mxu0
        %v1079 = vadd.f32 %v1077, %v1045
        %1080 = vst.msk [vmem:[%s459] sm:$0xff] %vm475, %v1079
        %s1081 = sand.u32 %s253, 1
        %s1082 = scalar_lea.sflag [#allocation6], %s1081
        %s1083 = sand.u32 %s253, 1
        %s1084 = smul.addr %s1083, 8
        %s1085 = scalar_lea.vmem [#allocation15], %s1084
        // Predicated region
        $region85: #{tpu_custom_call.1} parent=59 // pred_check
          %p1086 = pneg %p263
        $region86: #{tpu_custom_call.1} parent=59 // pred_check_branch
          %1088 = sbr.rel (%p1086) target = $region88
        $region87: #{tpu_custom_call.1} parent=59 // pred_region
          %1090 = vsyncadd %s1082, 0
          %s1091 = smul.addr %s30, 8
          %s1092 = scalar_lea.hbm %s10, %s1091
          %s1094 = sshll.u32 %s1085, 4
          %s1095 = int_to_ptr.vmem [resolvable:$true] %s1094
          %s1096 = sshll.u32 %s1092, 4
          %s1097 = int_to_ptr.hbm [resolvable:$true] %s1096
          %1099 = dma.vmem_to_hbm [thread:$0]  %s1095, 128, %s1097, %s1082
        $region88: #{tpu_custom_call.1} parent=59 // pred_fallthru
          _
      $region60: #{tpu_custom_call.1} parent=5 // pred_fallthru
        _
      %p1100 = scmp.le.s32.totalorder 2, %s25
      // Predicated region
      $region89: #{tpu_custom_call.1} parent=5 // pred_check
        %p1101 = pneg %p1100
      $region90: #{tpu_custom_call.1} parent=5 // pred_check_branch
        %1103 = sbr.rel (%p1101) target = $region92
      $region91: #{tpu_custom_call.1} parent=5 // pred_region
        %s1104 = ssub.s32 %s25, 2
        // Predicated region
        $region93: #{tpu_custom_call.1} parent=91 // pred_check
          %p1105 = pneg %p269
        $region94: #{tpu_custom_call.1} parent=91 // pred_check_branch
          %1107 = sbr.rel (%p1105) target = $region96
        $region95: #{tpu_custom_call.1} parent=91 // pred_region
          %s1108 = sand.u32 %s254, 1
          %s1109 = scalar_lea.sflag [#allocation6], %s1108
          %s1110 = sand.u32 %s254, 1
          %s1111 = smul.addr %s1110, 8
          %s1112 = scalar_lea.vmem [#allocation15], %s1111
          %1114 = dma.done %s1109, 128
        $region96: #{tpu_custom_call.1} parent=91 // pred_fallthru
          _
      $region92: #{tpu_custom_call.1} parent=5 // pred_fallthru
        _
    $region6: #{tpu_custom_call.1} parent=1 // loop_footer
      %s29 = sadd.s32 1, %s25
    $region7: #{tpu_custom_call.1} parent=1 // loop_footer_branch
      %24 = sbr.rel target = $region3
    $region8: #{tpu_custom_call.1} parent=1 // loop_exit
      _
    %1115 = vsyncpa [#allocation5], 1
    %s1116 = scalar_lea.sflag [#allocation5], 1
    %1117 = vsyncpa %s1116, 1
    %1118 = vsyncpa [#allocation8], 1
    %1119 = vsyncpa [#allocation11], 1
    %1120 = vsyncpa [#allocation14], 1
    %1121 = vsyncpa [#allocation6], 1
    %s1122 = scalar_lea.sflag [#allocation6], 1
    %1123 = vsyncpa %s1122, 1

</llo_original>
